<compile_context>
chip_gen: v6e
topology: v6e:2x2x1
jax: 0.10.0
libtpu: 0.0.40
codegen_flags: <defaults>
</compile_context>

<pallas_src>
import numpy as np
import jax
import jax.numpy as jnp
from jax.experimental import pallas as pl
from jax.experimental.pallas import tpu as pltpu

# ----- configuration (scaled-down, consistent with the module) -----
LONGEST_WINDOW = 16          # reference uses 600; key_len must equal it (see header)
EMBED = 32
HEADS = 1
HEAD_DIM = 2 * EMBED // HEADS        # 64  (q/k feature size)
VEMBED = EMBED // 2                  # 16  (output / value feature size)
VHEAD_DIM = VEMBED // HEADS          # 16
N = 2                                # batch
L = 8                                # query length
W = 8                                # band window width
KEY_LEN = LONGEST_WINDOW             # key / value length
EPS = 1e-5                           # nn.LayerNorm default eps


# --------------------------- Pallas kernel + wrapper ---------------------------
def transformer_block(query, key, value, mask, params, longest_window=LONGEST_WINDOW):
    wq, wk, wv, wo, bo, gamma, beta = params
    n, l, hd = query.shape
    kl = key.shape[1]
    vd = value.shape[2]
    w = mask.shape[2]
    vembed = wo.shape[0]
    nl, nk = n * l, n * kl

    # Host-side packing:
    #   * stack raw q and k rows so both projections run as ONE MXU matmul,
    #   * concatenate Wq^T|Wk^T into a (hd, 2*hd) weight,
    #   * pack the tiny per-channel params into one (3, vembed) slab.
    qk_flat = jnp.concatenate([query.reshape(nl, hd), key.reshape(nk, hd)], axis=0)
    v_flat = value.reshape(nk, vd)
    wqk_t = jnp.concatenate([wq.T, wk.T], axis=1)        # (hd, 2*hd) = (64, 128)
    p3 = jnp.stack([bo, gamma, beta], axis=0)            # (3, vembed)

    def kernel(qk_ref, v_ref, m_ref, wqk_ref, wv_ref, wo_ref, p3_ref, x_ref, a_ref):
        qk = qk_ref[...]                                             # (nl+nk, hd) raw rows

        # fused q/k projection: one well-filled MXU call instead of two tiny ones
        proj = jnp.dot(qk, wqk_ref[...], preferred_element_type=jnp.float32)
        qp = proj[:nl, :hd].reshape(n, l, hd)                        # q @ Wq^T
        kp = proj[nl:, hd:].reshape(n, kl, hd)                       # k @ Wk^T
        vp = jnp.dot(v_ref[...], wv_ref[...],
                     preferred_element_type=jnp.float32).reshape(n, kl, vd)

        # banded gather as a one-hot matmul on the MXU (exact: each index selects
        # exactly one row; sentinel index == longest_window -> all-zero one-hot row,
        # matching the reference's appended zero row).
        idx = m_ref[...]                                             # (n, l, w) int32
        kiota = jax.lax.broadcasted_iota(jnp.int32, (n, l, w, kl), 3)
        onehot = (idx[..., None] == kiota).astype(jnp.float32)       # (n, l, w, kl)
        oh = onehot.reshape(n, l * w, kl)
        dn = (((2,), (1,)), ((0,), (0,)))                            # batched over n
        kg = jax.lax.dot_general(oh, kp, dn,
                                 preferred_element_type=jnp.float32).reshape(n, l, w, hd)
        vg = jax.lax.dot_general(oh, vp, dn,
                                 preferred_element_type=jnp.float32).reshape(n, l, w, vd)

        # banded scores + masking + softmax over the window
        energy = jnp.sum(qp[:, :, None, :] * kg, axis=-1)            # (n, l, w)
        energy = jnp.where(idx == longest_window, jnp.float32(-1e20), energy)
        mmax = jnp.max(energy, axis=-1, keepdims=True)
        e = jnp.exp(energy - mmax)
        attn = e / jnp.sum(e, axis=-1, keepdims=True)                # (n, l, w)

        # attention-weighted values, fc_out, residual with raw query, LayerNorm
        head_out = jnp.sum(attn[..., None] * vg, axis=2)             # (n, l, vd)
        p3v = p3_ref[...]                                            # (3, vembed)
        att = jnp.dot(head_out.reshape(nl, vd), wo_ref[...],
                      preferred_element_type=jnp.float32) + p3v[0:1, :]
        resid = att + qk[:nl, :vembed]                               # raw-query residual
        mu = jnp.mean(resid, axis=-1, keepdims=True)
        var = jnp.mean((resid - mu) ** 2, axis=-1, keepdims=True)
        xn = (resid - mu) * jax.lax.rsqrt(var + EPS)
        y = xn * p3v[1:2, :] + p3v[2:3, :]

        x_ref[...] = y.reshape(n, l, vembed)
        a_ref[...] = attn

    in_specs = [pl.BlockSpec(memory_space=pltpu.MemorySpace.VMEM) for _ in range(7)]
    out_specs = (pl.BlockSpec(memory_space=pltpu.MemorySpace.VMEM),
                 pl.BlockSpec(memory_space=pltpu.MemorySpace.VMEM))

    x, attn = pl.pallas_call(
        kernel,
        out_shape=(jax.ShapeDtypeStruct((n, l, vembed), jnp.float32),
                   jax.ShapeDtypeStruct((n, l, w), jnp.float32)),
        in_specs=in_specs,
        out_specs=out_specs,
    )(qk_flat, v_flat, mask, wqk_t, wv.T, wo.T, p3)
    return x, attn


# --------------------------- pure-JAX reference ---------------------------
def reference(query, key, value, mask, params):
    wq, wk, wv, wo, bo, gamma, beta = params
    n, l, hd = query.shape
    hp = "highest"
    qp = jnp.einsum("nld,ed->nle", query, wq, precision=hp)
    kp = jnp.einsum("nkd,ed->nke", key, wk, precision=hp)
    vp = jnp.einsum("nkd,ed->nke", value, wv, precision=hp)
    kpad = jnp.concatenate([kp, jnp.zeros((n, 1, hd), jnp.float32)], axis=1)
    vpad = jnp.concatenate([vp, jnp.zeros((n, 1, VHEAD_DIM), jnp.float32)], axis=1)
    idx = mask.reshape(n, l * W)
    kg = jnp.take_along_axis(kpad, idx[:, :, None], axis=1).reshape(n, l, W, hd)
    vg = jnp.take_along_axis(vpad, idx[:, :, None], axis=1).reshape(n, l, W, VHEAD_DIM)
    energy = jnp.einsum("nld,nlwd->nlw", qp, kg, precision=hp)
    energy = jnp.where(mask == LONGEST_WINDOW, jnp.float32(-1e20), energy)
    attn = jax.nn.softmax(energy, axis=-1)
    out = jnp.einsum("nlw,nlwd->nld", attn, vg, precision=hp)
    att = jnp.einsum("nld,ed->nle", out, wo, precision=hp) + bo
    resid = att + query[:, :, :VEMBED]
    mu = resid.mean(-1, keepdims=True)
    var = ((resid - mu) ** 2).mean(-1, keepdims=True)
    x = (resid - mu) / jnp.sqrt(var + EPS) * gamma + beta
    return x, attn


# --------------------------- main ---------------------------
if __name__ == "__main__":
    root = jax.random.PRNGKey(0)
    kq, kk, kv, km, kmask, kwq, kwk, kwv, kwo, kbo = jax.random.split(root, 10)

    query = jax.random.normal(kq, (N, L, HEAD_DIM), jnp.float32)
    key = jax.random.normal(kk, (N, KEY_LEN, HEAD_DIM), jnp.float32)
    value = jax.random.normal(kv, (N, KEY_LEN, VHEAD_DIM), jnp.float32)

    # band indices: random valid positions, ~25% marked masked (== LONGEST_WINDOW)
    idx = jax.random.randint(km, (N, L, W), 0, KEY_LEN, jnp.int32)
    masked = jax.random.bernoulli(kmask, 0.25, (N, L, W))
    mask = jnp.where(masked, jnp.int32(LONGEST_WINDOW), idx)

    # deterministic parameter init (PyTorch-like 1/sqrt(fan_in) scale)
    wq = jax.random.normal(kwq, (HEAD_DIM, HEAD_DIM), jnp.float32) / np.sqrt(HEAD_DIM)
    wk = jax.random.normal(kwk, (HEAD_DIM, HEAD_DIM), jnp.float32) / np.sqrt(HEAD_DIM)
    wv = jax.random.normal(kwv, (VHEAD_DIM, VHEAD_DIM), jnp.float32) / np.sqrt(VHEAD_DIM)
    wo = jax.random.normal(kwo, (VEMBED, VEMBED), jnp.float32) / np.sqrt(VEMBED)
    bo = jax.random.normal(kbo, (VEMBED,), jnp.float32) / np.sqrt(VEMBED)
    gamma = jnp.ones((VEMBED,), jnp.float32)    # nn.LayerNorm default init
    beta = jnp.zeros((VEMBED,), jnp.float32)
    params = (wq, wk, wv, wo, bo, gamma, beta)

    x, weights = transformer_block(query, key, value, mask, params)
    x = jax.block_until_ready(x)
    weights = jax.block_until_ready(weights)

    x_ref, w_ref = reference(query, key, value, mask, params)
    np.testing.assert_allclose(np.asarray(x), np.asarray(x_ref), rtol=2e-3, atol=2e-3)
    np.testing.assert_allclose(np.asarray(weights), np.asarray(w_ref), rtol=2e-3, atol=2e-3)

    assert x.shape == (N, L, VEMBED) and weights.shape == (N, L, W)
    print("KERNEL_OK")
</pallas_src>

<mosaic_0001>
module attributes {stable_mosaic.version = 11 : i64} {
  func.func @kernel(%arg0: memref<48x64xf32, #tpu.memory_space<vmem>>, %arg1: memref<32x16xf32, #tpu.memory_space<vmem>>, %arg2: memref<2x8x8xi32, #tpu.memory_space<vmem>>, %arg3: memref<64x128xf32, #tpu.memory_space<vmem>>, %arg4: memref<16x16xf32, #tpu.memory_space<vmem>>, %arg5: memref<16x16xf32, #tpu.memory_space<vmem>>, %arg6: memref<3x16xf32, #tpu.memory_space<vmem>>, %arg7: memref<2x8x16xf32, #tpu.memory_space<vmem>>, %arg8: memref<2x8x8xf32, #tpu.memory_space<vmem>>) attributes {dimension_semantics = [], scalar_prefetch = 0 : i64, scratch_operands = 0 : i64, tpu.core_type = #tpu.core_type<tc>} {
    %c0 = arith.constant 0 : index
    %c0_0 = arith.constant 0 : index
    %0 = vector.load %arg0[%c0, %c0_0] : memref<48x64xf32, #tpu.memory_space<vmem>>, vector<48x64xf32>
    %c0_1 = arith.constant 0 : index
    %c0_2 = arith.constant 0 : index
    %1 = vector.load %arg3[%c0_1, %c0_2] : memref<64x128xf32, #tpu.memory_space<vmem>>, vector<64x128xf32>
    %cst = arith.constant dense<0.000000e+00> : vector<48x128xf32>
    %2 = tpu.matmul %0, %1, %cst {dimension_numbers = #tpu.dot_dimension_numbers<[1], [0], [0], [1], [0, 0, 1, 1], [], []>} : vector<48x64xf32>, vector<64x128xf32>, vector<48x128xf32> -> vector<48x128xf32>
    %3 = vector.extract_strided_slice %2 {offsets = [0, 0], sizes = [16, 64], strides = [1, 1]} : vector<48x128xf32> to vector<16x64xf32>
    %4 = vector.shape_cast %3 : vector<16x64xf32> to vector<2x8x64xf32>
    %5 = vector.extract_strided_slice %2 {offsets = [16, 64], sizes = [32, 64], strides = [1, 1]} : vector<48x128xf32> to vector<32x64xf32>
    %6 = vector.shape_cast %5 : vector<32x64xf32> to vector<2x16x64xf32>
    %c0_3 = arith.constant 0 : index
    %c0_4 = arith.constant 0 : index
    %7 = vector.load %arg1[%c0_3, %c0_4] : memref<32x16xf32, #tpu.memory_space<vmem>>, vector<32x16xf32>
    %c0_5 = arith.constant 0 : index
    %c0_6 = arith.constant 0 : index
    %8 = vector.load %arg4[%c0_5, %c0_6] : memref<16x16xf32, #tpu.memory_space<vmem>>, vector<16x16xf32>
    %cst_7 = arith.constant dense<0.000000e+00> : vector<32x16xf32>
    %9 = tpu.matmul %7, %8, %cst_7 {dimension_numbers = #tpu.dot_dimension_numbers<[1], [0], [0], [1], [0, 0, 1, 1], [], []>} : vector<32x16xf32>, vector<16x16xf32>, vector<32x16xf32> -> vector<32x16xf32>
    %10 = vector.shape_cast %9 : vector<32x16xf32> to vector<2x16x16xf32>
    %c0_8 = arith.constant 0 : index
    %c0_9 = arith.constant 0 : index
    %c0_10 = arith.constant 0 : index
    %11 = vector.load %arg2[%c0_8, %c0_9, %c0_10] : memref<2x8x8xi32, #tpu.memory_space<vmem>>, vector<2x8x8xi32>
    %12 = tpu.iota {dimensions = array<i32: 3>} : vector<2x8x8x16xi32>
    %13 = vector.shape_cast %11 : vector<2x8x8xi32> to vector<2x8x8x1xi32>
    %14 = vector.broadcast %13 : vector<2x8x8x1xi32> to vector<2x8x8x16xi32>
    %15 = arith.cmpi eq, %14, %12 : vector<2x8x8x16xi32>
    %16 = arith.extui %15 : vector<2x8x8x16xi1> to vector<2x8x8x16xi32>
    %17 = arith.sitofp %16 : vector<2x8x8x16xi32> to vector<2x8x8x16xf32>
    %18 = vector.shape_cast %17 : vector<2x8x8x16xf32> to vector<2x64x16xf32>
    %cst_11 = arith.constant dense<0.000000e+00> : vector<2x64x64xf32>
    %19 = tpu.matmul %18, %6, %cst_11 {dimension_numbers = #tpu.dot_dimension_numbers<[2], [1], [1], [2], [0, 0, 0, 1, 1, 2], [0], [0]>} : vector<2x64x16xf32>, vector<2x16x64xf32>, vector<2x64x64xf32> -> vector<2x64x64xf32>
    %20 = vector.shape_cast %19 : vector<2x64x64xf32> to vector<2x8x8x64xf32>
    %cst_12 = arith.constant dense<0.000000e+00> : vector<2x64x16xf32>
    %21 = tpu.matmul %18, %10, %cst_12 {dimension_numbers = #tpu.dot_dimension_numbers<[2], [1], [1], [2], [0, 0, 0, 1, 1, 2], [0], [0]>} : vector<2x64x16xf32>, vector<2x16x16xf32>, vector<2x64x16xf32> -> vector<2x64x16xf32>
    %22 = vector.shape_cast %21 : vector<2x64x16xf32> to vector<2x8x8x16xf32>
    %23 = vector.shape_cast %4 : vector<2x8x64xf32> to vector<2x8x1x64xf32>
    %24 = vector.broadcast %23 : vector<2x8x1x64xf32> to vector<2x8x8x64xf32>
    %25 = arith.mulf %24, %20 : vector<2x8x8x64xf32>
    %cst_13 = arith.constant dense<0.000000e+00> : vector<2x8x8xf32>
    %26 = vector.multi_reduction <add>, %25, %cst_13 [3] : vector<2x8x8x64xf32> to vector<2x8x8xf32>
    %c16_i32 = arith.constant 16 : i32
    %27 = vector.broadcast %c16_i32 : i32 to vector<2x8x8xi32>
    %28 = arith.cmpi eq, %11, %27 : vector<2x8x8xi32>
    %cst_14 = arith.constant -1.000000e+20 : f32
    %29 = vector.broadcast %cst_14 : f32 to vector<2x8x8xf32>
    %30 = arith.select %28, %29, %26 : vector<2x8x8xi1>, vector<2x8x8xf32>
    %cst_15 = arith.constant dense<0xFF800000> : vector<2x8xf32>
    %31 = vector.multi_reduction <maximumf>, %30, %cst_15 [2] : vector<2x8x8xf32> to vector<2x8xf32>
    %32 = vector.shape_cast %31 : vector<2x8xf32> to vector<2x8x1xf32>
    %33 = vector.broadcast %32 : vector<2x8x1xf32> to vector<2x8x8xf32>
    %34 = arith.subf %30, %33 : vector<2x8x8xf32>
    %35 = math.exp %34 : vector<2x8x8xf32>
    %cst_16 = arith.constant dense<0.000000e+00> : vector<2x8xf32>
    %36 = vector.multi_reduction <add>, %35, %cst_16 [2] : vector<2x8x8xf32> to vector<2x8xf32>
    %37 = vector.shape_cast %36 : vector<2x8xf32> to vector<2x8x1xf32>
    %38 = vector.broadcast %37 : vector<2x8x1xf32> to vector<2x8x8xf32>
    %39 = arith.divf %35, %38 : vector<2x8x8xf32>
    %40 = vector.shape_cast %39 : vector<2x8x8xf32> to vector<2x8x8x1xf32>
    %41 = vector.broadcast %40 : vector<2x8x8x1xf32> to vector<2x8x8x16xf32>
    %42 = arith.mulf %41, %22 : vector<2x8x8x16xf32>
    %cst_17 = arith.constant dense<0.000000e+00> : vector<2x8x16xf32>
    %43 = vector.multi_reduction <add>, %42, %cst_17 [2] : vector<2x8x8x16xf32> to vector<2x8x16xf32>
    %c0_18 = arith.constant 0 : index
    %c0_19 = arith.constant 0 : index
    %44 = vector.load %arg6[%c0_18, %c0_19] : memref<3x16xf32, #tpu.memory_space<vmem>>, vector<3x16xf32>
    %45 = vector.shape_cast %43 : vector<2x8x16xf32> to vector<16x16xf32>
    %c0_20 = arith.constant 0 : index
    %c0_21 = arith.constant 0 : index
    %46 = vector.load %arg5[%c0_20, %c0_21] : memref<16x16xf32, #tpu.memory_space<vmem>>, vector<16x16xf32>
    %cst_22 = arith.constant dense<0.000000e+00> : vector<16x16xf32>
    %47 = tpu.matmul %45, %46, %cst_22 {dimension_numbers = #tpu.dot_dimension_numbers<[1], [0], [0], [1], [0, 0, 1, 1], [], []>} : vector<16x16xf32>, vector<16x16xf32>, vector<16x16xf32> -> vector<16x16xf32>
    %48 = vector.extract_strided_slice %44 {offsets = [0, 0], sizes = [1, 16], strides = [1, 1]} : vector<3x16xf32> to vector<1x16xf32>
    %49 = vector.broadcast %48 : vector<1x16xf32> to vector<16x16xf32>
    %50 = arith.addf %47, %49 : vector<16x16xf32>
    %51 = vector.extract_strided_slice %0 {offsets = [0, 0], sizes = [16, 16], strides = [1, 1]} : vector<48x64xf32> to vector<16x16xf32>
    %52 = arith.addf %50, %51 : vector<16x16xf32>
    %cst_23 = arith.constant dense<0.000000e+00> : vector<16xf32>
    %53 = vector.multi_reduction <add>, %52, %cst_23 [1] : vector<16x16xf32> to vector<16xf32>
    %54 = vector.shape_cast %53 : vector<16xf32> to vector<16x1xf32>
    %cst_24 = arith.constant 1.600000e+01 : f32
    %55 = vector.broadcast %cst_24 : f32 to vector<16x1xf32>
    %56 = arith.divf %54, %55 : vector<16x1xf32>
    %57 = vector.broadcast %56 : vector<16x1xf32> to vector<16x16xf32>
    %58 = arith.subf %52, %57 : vector<16x16xf32>
    %59 = arith.mulf %58, %58 : vector<16x16xf32>
    %cst_25 = arith.constant dense<0.000000e+00> : vector<16xf32>
    %60 = vector.multi_reduction <add>, %59, %cst_25 [1] : vector<16x16xf32> to vector<16xf32>
    %61 = vector.shape_cast %60 : vector<16xf32> to vector<16x1xf32>
    %cst_26 = arith.constant 1.600000e+01 : f32
    %62 = vector.broadcast %cst_26 : f32 to vector<16x1xf32>
    %63 = arith.divf %61, %62 : vector<16x1xf32>
    %64 = vector.broadcast %56 : vector<16x1xf32> to vector<16x16xf32>
    %65 = arith.subf %52, %64 : vector<16x16xf32>
    %cst_27 = arith.constant 9.99999974E-6 : f32
    %66 = vector.broadcast %cst_27 : f32 to vector<16x1xf32>
    %67 = arith.addf %63, %66 : vector<16x1xf32>
    %68 = math.rsqrt %67 : vector<16x1xf32>
    %69 = vector.broadcast %68 : vector<16x1xf32> to vector<16x16xf32>
    %70 = arith.mulf %65, %69 : vector<16x16xf32>
    %71 = vector.extract_strided_slice %44 {offsets = [1, 0], sizes = [1, 16], strides = [1, 1]} : vector<3x16xf32> to vector<1x16xf32>
    %72 = vector.broadcast %71 : vector<1x16xf32> to vector<16x16xf32>
    %73 = arith.mulf %70, %72 : vector<16x16xf32>
    %74 = vector.extract_strided_slice %44 {offsets = [2, 0], sizes = [1, 16], strides = [1, 1]} : vector<3x16xf32> to vector<1x16xf32>
    %75 = vector.broadcast %74 : vector<1x16xf32> to vector<16x16xf32>
    %76 = arith.addf %73, %75 : vector<16x16xf32>
    %77 = vector.shape_cast %76 : vector<16x16xf32> to vector<2x8x16xf32>
    %c0_28 = arith.constant 0 : index
    %c0_29 = arith.constant 0 : index
    %c0_30 = arith.constant 0 : index
    %78 = vector.load %arg7[%c0_28, %c0_29, %c0_30] : memref<2x8x16xf32, #tpu.memory_space<vmem>>, vector<2x8x16xf32>
    tpu.vector_store %arg7[%c0_28, %c0_29, %c0_30], %77 {strides = array<i32>} : memref<2x8x16xf32, #tpu.memory_space<vmem>>, vector<2x8x16xf32>,
    %c0_31 = arith.constant 0 : index
    %c0_32 = arith.constant 0 : index
    %c0_33 = arith.constant 0 : index
    %79 = vector.load %arg8[%c0_31, %c0_32, %c0_33] : memref<2x8x8xf32, #tpu.memory_space<vmem>>, vector<2x8x8xf32>
    tpu.vector_store %arg8[%c0_31, %c0_32, %c0_33], %39 {strides = array<i32>} : memref<2x8x8xf32, #tpu.memory_space<vmem>>, vector<2x8x8xf32>,
    return
  }
}

</mosaic_0001>

<llo_original>
// kernel: tpu_custom_call.1
$region0: #{tpu_custom_call.1}
  #allocation0 [shape = 'u32[]', space=smem, size = 0x4, offset = 0x4, fixed_abs, tag = 'smem constant byte address 0x4 - core index']
  #allocation1 [shape = 'u32[144,128]{1,0:T(1,128)}', space=vmem, size = 0x12000, scoped, tag = 'internal scratch']
  %s0 = inlined_call_operand.vmem [shape: f32[48,64], index: 0, kind: input, shape index: {}]
  %s1 = inlined_call_operand.vmem [shape: f32[32,16], index: 1, kind: input, shape index: {}]
  %s2 = inlined_call_operand.hbm [shape: s32[2,8,8], index: 2, kind: input, shape index: {}]
  %s3 = inlined_call_operand.hbm [shape: f32[64,128], index: 3, kind: input, shape index: {}]
  %s4 = inlined_call_operand.hbm [shape: f32[16,16], index: 4, kind: input, shape index: {}]
  %s5 = inlined_call_operand.hbm [shape: f32[16,16], index: 5, kind: input, shape index: {}]
  %s6 = inlined_call_operand.vmem [shape: f32[3,16], index: 6, kind: input, shape index: {}]
  %s7 = inlined_call_operand.hbm [shape: f32[2,8,16], index: 7, kind: output, shape index: {0}]
  %s8 = inlined_call_operand.hbm [shape: f32[2,8,8], index: 8, kind: output, shape index: {1}]
  %9 = xla_tuple %s7, %s8
  %s10 = sld [smem:[#allocation0]]
  $region62: #{tpu_custom_call.1} parent=0
    _
  %s12 = ssub.s32 1, %s10
  %s13 = scalar_select 0, %s12, %s10
  $region1: #{tpu_custom_call.1} parent=0
    #allocation2 [shape = 'u8[8192]{0}', space=vmem, size = 0x2000, scoped, tag = 'input window, operand 2, single buffered']
    #allocation3 [shape = 's32[1]{0}', space=sflag, size = 0x4, scoped, tag = 'scoped memory for tpu_custom_call.1']
    #allocation4 [shape = 's32[1]{0}', space=sflag, size = 0x4, scoped, tag = 'scoped memory for tpu_custom_call.1']
    #allocation5 [shape = 'u8[32768]{0}', space=vmem, size = 0x8000, scoped, tag = 'input window, operand 3, single buffered']
    #allocation6 [shape = 's32[1]{0}', space=sflag, size = 0x4, scoped, tag = 'scoped memory for tpu_custom_call.1']
    #allocation7 [shape = 'u8[8192]{0}', space=vmem, size = 0x2000, scoped, tag = 'input window, operand 4, single buffered']
    #allocation8 [shape = 'u8[8192]{0}', space=vmem, size = 0x2000, scoped, tag = 'input window, operand 5, single buffered']
    #allocation9 [shape = 's32[1]{0}', space=sflag, size = 0x4, scoped, tag = 'scoped memory for tpu_custom_call.1']
    #allocation10 [shape = 'u8[8192]{0}', space=vmem, size = 0x2000, scoped, tag = 'output window, operand 0, single buffered']
    #allocation11 [shape = 'u8[8192]{0}', space=vmem, size = 0x2000, scoped, tag = 'output window, operand 1, single buffered']
    #allocation12 [shape = 's32[1]{0}', space=sflag, size = 0x4, scoped, tag = 'scoped memory for tpu_custom_call.1']
    %14 = vsyncpa [#allocation3], 0
    %15 = vsyncpa [#allocation6], 0
    %16 = vsyncpa [#allocation9], 0
    %17 = vsyncpa [#allocation4], 0
    %18 = vsyncpa [#allocation12], 0
    // Predicated region
    $region2: #{tpu_custom_call.1} parent=1 // pred_check
      _
    $region3: #{tpu_custom_call.1} parent=1 // pred_check_branch
      %20 = sbr.rel (0) target = $region5
    $region4: #{tpu_custom_call.1} parent=1 // pred_region
      _
    $region5: #{tpu_custom_call.1} parent=1 // pred_fallthru
      _
    // Predicated region
    $region6: #{tpu_custom_call.1} parent=1 // pred_check
      _
    $region7: #{tpu_custom_call.1} parent=1 // pred_check_branch
      %22 = sbr.rel (0) target = $region9
    $region8: #{tpu_custom_call.1} parent=1 // pred_region
      _
    $region9: #{tpu_custom_call.1} parent=1 // pred_fallthru
      _
    // Predicated region
    $region10: #{tpu_custom_call.1} parent=1 // pred_check
      _
    $region11: #{tpu_custom_call.1} parent=1 // pred_check_branch
      %24 = sbr.rel (0) target = $region13
    $region12: #{tpu_custom_call.1} parent=1 // pred_region
      %s26 = ssub.s32 256, 256
      %27 = vsyncadd [#allocation3], %s26
      %s28 = sshll.u32 [#allocation2], 4
      %s29 = int_to_ptr.vmem [resolvable:$true] %s28
      %34 = dma.hbm_to_vmem [thread:$0]  %s2, 256, %s29, [#allocation3], 128, 128, 8
    $region13: #{tpu_custom_call.1} parent=1 // pred_fallthru
      _
    // Predicated region
    $region14: #{tpu_custom_call.1} parent=1 // pred_check
      _
    $region15: #{tpu_custom_call.1} parent=1 // pred_check_branch
      %36 = sbr.rel (0) target = $region17
    $region16: #{tpu_custom_call.1} parent=1 // pred_region
      %s38 = ssub.s32 1024, 1024
      %39 = vsyncadd [#allocation6], %s38
      %s40 = sshll.u32 [#allocation5], 4
      %s41 = int_to_ptr.vmem [resolvable:$true] %s40
      %46 = dma.hbm_to_vmem [thread:$0]  %s3, 1024, %s41, [#allocation6], 128, 128, 8
    $region17: #{tpu_custom_call.1} parent=1 // pred_fallthru
      _
    // Predicated region
    $region18: #{tpu_custom_call.1} parent=1 // pred_check
      _
    $region19: #{tpu_custom_call.1} parent=1 // pred_check_branch
      %48 = sbr.rel (0) target = $region21
    $region20: #{tpu_custom_call.1} parent=1 // pred_region
      %s50 = ssub.s32 256, 256
      %51 = vsyncadd [#allocation6], %s50
      %s52 = sshll.u32 [#allocation7], 4
      %s53 = int_to_ptr.vmem [resolvable:$true] %s52
      %58 = dma.hbm_to_vmem [thread:$0]  %s4, 256, %s53, [#allocation6], 128, 128, 8
    $region21: #{tpu_custom_call.1} parent=1 // pred_fallthru
      _
    // Predicated region
    $region22: #{tpu_custom_call.1} parent=1 // pred_check
      _
    $region23: #{tpu_custom_call.1} parent=1 // pred_check_branch
      %60 = sbr.rel (0) target = $region25
    $region24: #{tpu_custom_call.1} parent=1 // pred_region
      %s62 = ssub.s32 256, 256
      %63 = vsyncadd [#allocation9], %s62
      %s64 = sshll.u32 [#allocation8], 4
      %s65 = int_to_ptr.vmem [resolvable:$true] %s64
      %70 = dma.hbm_to_vmem [thread:$0]  %s5, 256, %s65, [#allocation9], 128, 128, 8
    $region25: #{tpu_custom_call.1} parent=1 // pred_fallthru
      _
    // Predicated region
    $region26: #{tpu_custom_call.1} parent=1 // pred_check
      _
    $region27: #{tpu_custom_call.1} parent=1 // pred_check_branch
      %72 = sbr.rel (0) target = $region29
    $region28: #{tpu_custom_call.1} parent=1 // pred_region
      _
    $region29: #{tpu_custom_call.1} parent=1 // pred_fallthru
      _
    // Predicated region
    $region30: #{tpu_custom_call.1} parent=1 // pred_check
      _
    $region31: #{tpu_custom_call.1} parent=1 // pred_check_branch
      %74 = sbr.rel (0) target = $region33
    $region32: #{tpu_custom_call.1} parent=1 // pred_region
      %75 = dma.done [#allocation3], 256
    $region33: #{tpu_custom_call.1} parent=1 // pred_fallthru
      _
    // Predicated region
    $region34: #{tpu_custom_call.1} parent=1 // pred_check
      _
    $region35: #{tpu_custom_call.1} parent=1 // pred_check_branch
      %77 = sbr.rel (0) target = $region37
    $region36: #{tpu_custom_call.1} parent=1 // pred_region
      %78 = dma.done [#allocation6], 1024
    $region37: #{tpu_custom_call.1} parent=1 // pred_fallthru
      _
    // Predicated region
    $region38: #{tpu_custom_call.1} parent=1 // pred_check
      _
    $region39: #{tpu_custom_call.1} parent=1 // pred_check_branch
      %80 = sbr.rel (0) target = $region41
    $region40: #{tpu_custom_call.1} parent=1 // pred_region
      %81 = dma.done [#allocation6], 256
    $region41: #{tpu_custom_call.1} parent=1 // pred_fallthru
      _
    // Predicated region
    $region42: #{tpu_custom_call.1} parent=1 // pred_check
      _
    $region43: #{tpu_custom_call.1} parent=1 // pred_check_branch
      %83 = sbr.rel (0) target = $region45
    $region44: #{tpu_custom_call.1} parent=1 // pred_region
      %84 = dma.done [#allocation9], 256
    $region45: #{tpu_custom_call.1} parent=1 // pred_fallthru
      _
    %v85 = vld [vmem:[%s0] sm:$0xff]
    %v86 = vld [vmem:[%s0 + $0x8] sm:$0xff]
    %v87 = vld [vmem:[%s0 + $0x10] sm:$0xff]
    %v88 = vld [vmem:[%s0 + $0x18] sm:$0xff]
    %v89 = vld [vmem:[%s0 + $0x20] sm:$0xff]
    %v90 = vld [vmem:[%s0 + $0x28] sm:$0xff]
    %v91 = vld [vmem:[#allocation5] sm:$0xff]
    %v92 = vld [vmem:[#allocation5 + $0x8] sm:$0xff]
    %v93 = vld [vmem:[#allocation5 + $0x10] sm:$0xff]
    %v94 = vld [vmem:[#allocation5 + $0x18] sm:$0xff]
    %v95 = vld [vmem:[#allocation5 + $0x20] sm:$0xff]
    %v96 = vld [vmem:[#allocation5 + $0x28] sm:$0xff]
    %v97 = vld [vmem:[#allocation5 + $0x30] sm:$0xff]
    %v98 = vld [vmem:[#allocation5 + $0x38] sm:$0xff]
    %vm99 = vcmask 523264
    %v101 = vsel %vm99, %v85, 0
    %v104 = vsel %vm99, %v86, 0
    %v107 = vsel %vm99, %v87, 0
    %v110 = vsel %vm99, %v88, 0
    %v113 = vsel %vm99, %v89, 0
    %v116 = vsel %vm99, %v90, 0
    %118 = vmatprep.subr.mxu0 0.0
    %119 = vmatpush1.msra.mxu0 0.0
    %120 = vmatprep.subr.mxu0 0.0
    %121 = vmatpush1.msra.mxu0 0.0
    %122 = vmatprep.subr.mxu0 0.0
    %123 = vmatpush1.msra.mxu0 0.0
    %124 = vmatprep.subr.mxu0 0.0
    %125 = vmatpush1.msra.mxu0 0.0
    %126 = vmatprep.subr.mxu0 0.0
    %127 = vmatpush1.msra.mxu0 0.0
    %128 = vmatprep.subr.mxu0 0.0
    %129 = vmatpush1.msra.mxu0 0.0
    %130 = vmatprep.subr.mxu0 0.0
    %131 = vmatpush1.msra.mxu0 0.0
    %132 = vmatprep.subr.mxu0 0.0
    %133 = vmatpush1.msra.mxu0 0.0
    %134 = vmatprep.subr.mxu0 0.0
    %135 = vmatpush1.msra.mxu0 %v98
    %136 = vmatprep.subr.mxu0 0.0
    %137 = vmatpush1.msra.mxu0 %v97
    %138 = vmatprep.subr.mxu0 0.0
    %139 = vmatpush1.msra.mxu0 %v96
    %140 = vmatprep.subr.mxu0 0.0
    %141 = vmatpush1.msra.mxu0 %v95
    %142 = vmatprep.subr.mxu0 0.0
    %143 = vmatpush1.msra.mxu0 %v94
    %144 = vmatprep.subr.mxu0 0.0
    %145 = vmatpush1.msra.mxu0 %v93
    %146 = vmatprep.subr.mxu0 0.0
    %147 = vmatpush1.msra.mxu0 %v92
    %148 = vmatprep.subr.mxu0 0.0
    %149 = vmatpush1.msra.mxu0 %v91
    %150 = vmatprep.subr.mxu0 0.0
    %151 = vmatpush2.msra.mxu0 0.0
    %152 = vmatprep.subr.mxu0 0.0
    %153 = vmatpush2.msra.mxu0 0.0
    %154 = vmatprep.subr.mxu0 0.0
    %155 = vmatpush2.msra.mxu0 0.0
    %156 = vmatprep.subr.mxu0 0.0
    %157 = vmatpush2.msra.mxu0 0.0
    %158 = vmatprep.subr.mxu0 0.0
    %159 = vmatpush2.msra.mxu0 0.0
    %160 = vmatprep.subr.mxu0 0.0
    %161 = vmatpush2.msra.mxu0 0.0
    %162 = vmatprep.subr.mxu0 0.0
    %163 = vmatpush2.msra.mxu0 0.0
    %164 = vmatprep.subr.mxu0 0.0
    %165 = vmatpush2.msra.mxu0 0.0
    %166 = vmatprep.subr.mxu0 0.0
    %167 = vmatpush2.msra.mxu0 0.0
    %168 = vmatprep.subr.mxu0 0.0
    %169 = vmatpush2.msra.mxu0 0.0
    %170 = vmatprep.subr.mxu0 0.0
    %171 = vmatpush2.msra.mxu0 0.0
    %172 = vmatprep.subr.mxu0 0.0
    %173 = vmatpush2.msra.mxu0 0.0
    %174 = vmatprep.subr.mxu0 0.0
    %175 = vmatpush2.msra.mxu0 0.0
    %176 = vmatprep.subr.mxu0 0.0
    %177 = vmatpush2.msra.mxu0 0.0
    %178 = vmatprep.subr.mxu0 0.0
    %179 = vmatpush2.msra.mxu0 0.0
    %180 = vmatprep.subr.mxu0 0.0
    %181 = vmatpush2.msra.mxu0 0.0
    %182 = vmatprep.mubr.f32.mxu0 0.0
    %183 = vmatmul.mubr.f32.gmra.mxu0 %v101
    %v184 = vpop.f32.mrf.mxu0
    %v185 = vadd.f32 0.0, %v184
    %v186 = vpop.f32.mrf.mxu0
    %187 = vmatprep.mubr.f32.mxu0 0.0
    %188 = vmatmul.mubr.f32.gmra.mxu0 %v104
    %v189 = vpop.f32.mrf.mxu0
    %v190 = vadd.f32 0.0, %v189
    %v191 = vpop.f32.mrf.mxu0
    %192 = vmatprep.mubr.f32.mxu0 0.0
    %193 = vmatmul.mubr.f32.gmra.mxu0 %v107
    %v194 = vpop.f32.mrf.mxu0
    %v195 = vadd.f32 0.0, %v194
    %v196 = vpop.f32.mrf.mxu0
    %197 = vmatprep.mubr.f32.mxu0 0.0
    %198 = vmatmul.mubr.f32.gmra.mxu0 %v110
    %v199 = vpop.f32.mrf.mxu0
    %v200 = vadd.f32 0.0, %v199
    %v201 = vpop.f32.mrf.mxu0
    %202 = vmatprep.mubr.f32.mxu0 0.0
    %203 = vmatmul.mubr.f32.gmra.mxu0 %v113
    %v204 = vpop.f32.mrf.mxu0
    %v205 = vadd.f32 0.0, %v204
    %v206 = vpop.f32.mrf.mxu0
    %207 = vmatprep.mubr.f32.mxu0 0.0
    %208 = vmatmul.mubr.f32.gmra.mxu0 %v116
    %v209 = vpop.f32.mrf.mxu0
    %v210 = vadd.f32 0.0, %v209
    %v211 = vpop.f32.mrf.mxu0
    %212 = vdwg.mxu0
    %v213 = vld [vmem:[%s1] sm:$0xff]
    %v214 = vld [vmem:[%s1 + $0x8] sm:$0xff]
    %v215 = vld [vmem:[%s1 + $0x10] sm:$0xff]
    %v216 = vld [vmem:[%s1 + $0x18] sm:$0xff]
    %v217 = vld [vmem:[#allocation7] sm:$0xff]
    %v218 = vld [vmem:[#allocation7 + $0x8] sm:$0xff]
    %vm219 = vcmask 130048
    %v221 = vsel %vm219, %v213, 0
    %v224 = vsel %vm219, %v214, 0
    %v227 = vsel %vm219, %v215, 0
    %v230 = vsel %vm219, %v216, 0
    %232 = vmatprep.subr.mxu0 0.0
    %233 = vmatpush1.msra.mxu0 0.0
    %234 = vmatprep.subr.mxu0 0.0
    %235 = vmatpush1.msra.mxu0 0.0
    %236 = vmatprep.subr.mxu0 0.0
    %237 = vmatpush1.msra.mxu0 0.0
    %238 = vmatprep.subr.mxu0 0.0
    %239 = vmatpush1.msra.mxu0 0.0
    %240 = vmatprep.subr.mxu0 0.0
    %241 = vmatpush1.msra.mxu0 0.0
    %242 = vmatprep.subr.mxu0 0.0
    %243 = vmatpush1.msra.mxu0 0.0
    %244 = vmatprep.subr.mxu0 0.0
    %245 = vmatpush1.msra.mxu0 0.0
    %246 = vmatprep.subr.mxu0 0.0
    %247 = vmatpush1.msra.mxu0 0.0
    %248 = vmatprep.subr.mxu0 0.0
    %249 = vmatpush1.msra.mxu0 0.0
    %250 = vmatprep.subr.mxu0 0.0
    %251 = vmatpush1.msra.mxu0 0.0
    %252 = vmatprep.subr.mxu0 0.0
    %253 = vmatpush1.msra.mxu0 0.0
    %254 = vmatprep.subr.mxu0 0.0
    %255 = vmatpush1.msra.mxu0 0.0
    %256 = vmatprep.subr.mxu0 0.0
    %257 = vmatpush1.msra.mxu0 0.0
    %258 = vmatprep.subr.mxu0 0.0
    %259 = vmatpush1.msra.mxu0 0.0
    %260 = vmatprep.subr.mxu0 0.0
    %261 = vmatpush1.msra.mxu0 %v218
    %262 = vmatprep.subr.mxu0 0.0
    %263 = vmatpush1.msra.mxu0 %v217
    %264 = vmatprep.subr.mxu0 0.0
    %265 = vmatpush2.msra.mxu0 0.0
    %266 = vmatprep.subr.mxu0 0.0
    %267 = vmatpush2.msra.mxu0 0.0
    %268 = vmatprep.subr.mxu0 0.0
    %269 = vmatpush2.msra.mxu0 0.0
    %270 = vmatprep.subr.mxu0 0.0
    %271 = vmatpush2.msra.mxu0 0.0
    %272 = vmatprep.subr.mxu0 0.0
    %273 = vmatpush2.msra.mxu0 0.0
    %274 = vmatprep.subr.mxu0 0.0
    %275 = vmatpush2.msra.mxu0 0.0
    %276 = vmatprep.subr.mxu0 0.0
    %277 = vmatpush2.msra.mxu0 0.0
    %278 = vmatprep.subr.mxu0 0.0
    %279 = vmatpush2.msra.mxu0 0.0
    %280 = vmatprep.subr.mxu0 0.0
    %281 = vmatpush2.msra.mxu0 0.0
    %282 = vmatprep.subr.mxu0 0.0
    %283 = vmatpush2.msra.mxu0 0.0
    %284 = vmatprep.subr.mxu0 0.0
    %285 = vmatpush2.msra.mxu0 0.0
    %286 = vmatprep.subr.mxu0 0.0
    %287 = vmatpush2.msra.mxu0 0.0
    %288 = vmatprep.subr.mxu0 0.0
    %289 = vmatpush2.msra.mxu0 0.0
    %290 = vmatprep.subr.mxu0 0.0
    %291 = vmatpush2.msra.mxu0 0.0
    %292 = vmatprep.subr.mxu0 0.0
    %293 = vmatpush2.msra.mxu0 0.0
    %294 = vmatprep.subr.mxu0 0.0
    %295 = vmatpush2.msra.mxu0 0.0
    %296 = vmatprep.mubr.f32.mxu0 0.0
    %297 = vmatmul.mubr.f32.gmra.mxu0 %v221
    %v298 = vpop.f32.mrf.mxu0
    %v299 = vadd.f32 0.0, %v298
    %v300 = vpop.f32.mrf.mxu0
    %301 = vmatprep.mubr.f32.mxu0 0.0
    %302 = vmatmul.mubr.f32.gmra.mxu0 %v224
    %v303 = vpop.f32.mrf.mxu0
    %v304 = vadd.f32 0.0, %v303
    %v305 = vpop.f32.mrf.mxu0
    %306 = vmatprep.mubr.f32.mxu0 0.0
    %307 = vmatmul.mubr.f32.gmra.mxu0 %v227
    %v308 = vpop.f32.mrf.mxu0
    %v309 = vadd.f32 0.0, %v308
    %v310 = vpop.f32.mrf.mxu0
    %311 = vmatprep.mubr.f32.mxu0 0.0
    %312 = vmatmul.mubr.f32.gmra.mxu0 %v230
    %v313 = vpop.f32.mrf.mxu0
    %v314 = vadd.f32 0.0, %v313
    %v315 = vpop.f32.mrf.mxu0
    %316 = vdwg.mxu0
    %v317 = vld [vmem:[#allocation2] sm:$0xff]
    %v318 = vld [vmem:[#allocation2 + $0x8] sm:$0xff]
    %v319 = vlaneseq
    %v320 = vand.u32 %v319, 127
    %v321 = vlaneseq
    %v322 = vshrl.u32 %v321, 7
    %v323 = vsub.s32 0, %v322
    %v324 = vrot.slane %v317, %v323
    %326 = vbcast.lane.b32.xlu0 %v324, 256
    %v327 = vpop.permute.xlu0 %326
    %v328 = vlaneseq
    %v329 = vshrl.u32 %v328, 7
    %v330 = vsub.s32 1, %v329
    %v331 = vrot.slane %v317, %v330
    %333 = vbcast.lane.b32.xlu0 %v331, 256
    %v334 = vpop.permute.xlu0 %333
    %v335 = vlaneseq
    %v336 = vshrl.u32 %v335, 7
    %v337 = vsub.s32 2, %v336
    %v338 = vrot.slane %v317, %v337
    %340 = vbcast.lane.b32.xlu0 %v338, 256
    %v341 = vpop.permute.xlu0 %340
    %v342 = vlaneseq
    %v343 = vshrl.u32 %v342, 7
    %v344 = vsub.s32 3, %v343
    %v345 = vrot.slane %v317, %v344
    %347 = vbcast.lane.b32.xlu0 %v345, 256
    %v348 = vpop.permute.xlu0 %347
    %v349 = vlaneseq
    %v350 = vshrl.u32 %v349, 7
    %v351 = vsub.s32 4, %v350
    %v352 = vrot.slane %v317, %v351
    %354 = vbcast.lane.b32.xlu0 %v352, 256
    %v355 = vpop.permute.xlu0 %354
    %v356 = vlaneseq
    %v357 = vshrl.u32 %v356, 7
    %v358 = vsub.s32 5, %v357
    %v359 = vrot.slane %v317, %v358
    %361 = vbcast.lane.b32.xlu0 %v359, 256
    %v362 = vpop.permute.xlu0 %361
    %v363 = vlaneseq
    %v364 = vshrl.u32 %v363, 7
    %v365 = vsub.s32 6, %v364
    %v366 = vrot.slane %v317, %v365
    %368 = vbcast.lane.b32.xlu0 %v366, 256
    %v369 = vpop.permute.xlu0 %368
    %v370 = vlaneseq
    %v371 = vshrl.u32 %v370, 7
    %v372 = vsub.s32 7, %v371
    %v373 = vrot.slane %v317, %v372
    %375 = vbcast.lane.b32.xlu0 %v373, 256
    %v376 = vpop.permute.xlu0 %375
    %v377 = vlaneseq
    %v378 = vshrl.u32 %v377, 7
    %v379 = vsub.s32 0, %v378
    %v380 = vrot.slane %v318, %v379
    %382 = vbcast.lane.b32.xlu0 %v380, 256
    %v383 = vpop.permute.xlu0 %382
    %v384 = vlaneseq
    %v385 = vshrl.u32 %v384, 7
    %v386 = vsub.s32 1, %v385
    %v387 = vrot.slane %v318, %v386
    %389 = vbcast.lane.b32.xlu0 %v387, 256
    %v390 = vpop.permute.xlu0 %389
    %v391 = vlaneseq
    %v392 = vshrl.u32 %v391, 7
    %v393 = vsub.s32 2, %v392
    %v394 = vrot.slane %v318, %v393
    %396 = vbcast.lane.b32.xlu0 %v394, 256
    %v397 = vpop.permute.xlu0 %396
    %v398 = vlaneseq
    %v399 = vshrl.u32 %v398, 7
    %v400 = vsub.s32 3, %v399
    %v401 = vrot.slane %v318, %v400
    %403 = vbcast.lane.b32.xlu0 %v401, 256
    %v404 = vpop.permute.xlu0 %403
    %v405 = vlaneseq
    %v406 = vshrl.u32 %v405, 7
    %v407 = vsub.s32 4, %v406
    %v408 = vrot.slane %v318, %v407
    %410 = vbcast.lane.b32.xlu0 %v408, 256
    %v411 = vpop.permute.xlu0 %410
    %v412 = vlaneseq
    %v413 = vshrl.u32 %v412, 7
    %v414 = vsub.s32 5, %v413
    %v415 = vrot.slane %v318, %v414
    %417 = vbcast.lane.b32.xlu0 %v415, 256
    %v418 = vpop.permute.xlu0 %417
    %v419 = vlaneseq
    %v420 = vshrl.u32 %v419, 7
    %v421 = vsub.s32 6, %v420
    %v422 = vrot.slane %v318, %v421
    %424 = vbcast.lane.b32.xlu0 %v422, 256
    %v425 = vpop.permute.xlu0 %424
    %v426 = vlaneseq
    %v427 = vshrl.u32 %v426, 7
    %v428 = vsub.s32 7, %v427
    %v429 = vrot.slane %v318, %v428
    %431 = vbcast.lane.b32.xlu0 %v429, 256
    %v432 = vpop.permute.xlu0 %431
    %vm433 = vcmp.eq.s32.totalorder %v327, %v320
    %vm434 = vcmp.eq.s32.totalorder %v334, %v320
    %vm435 = vcmp.eq.s32.totalorder %v341, %v320
    %vm436 = vcmp.eq.s32.totalorder %v348, %v320
    %vm437 = vcmp.eq.s32.totalorder %v355, %v320
    %vm438 = vcmp.eq.s32.totalorder %v362, %v320
    %vm439 = vcmp.eq.s32.totalorder %v369, %v320
    %vm440 = vcmp.eq.s32.totalorder %v376, %v320
    %vm441 = vcmp.eq.s32.totalorder %v383, %v320
    %vm442 = vcmp.eq.s32.totalorder %v390, %v320
    %vm443 = vcmp.eq.s32.totalorder %v397, %v320
    %vm444 = vcmp.eq.s32.totalorder %v404, %v320
    %vm445 = vcmp.eq.s32.totalorder %v411, %v320
    %vm446 = vcmp.eq.s32.totalorder %v418, %v320
    %vm447 = vcmp.eq.s32.totalorder %v425, %v320
    %vm448 = vcmp.eq.s32.totalorder %v432, %v320
    %v449 = vsel %vm433, 1, 0
    %v450 = vsel %vm434, 1, 0
    %v451 = vsel %vm435, 1, 0
    %v452 = vsel %vm436, 1, 0
    %v453 = vsel %vm437, 1, 0
    %v454 = vsel %vm438, 1, 0
    %v455 = vsel %vm439, 1, 0
    %v456 = vsel %vm440, 1, 0
    %v457 = vsel %vm441, 1, 0
    %v458 = vsel %vm442, 1, 0
    %v459 = vsel %vm443, 1, 0
    %v460 = vsel %vm444, 1, 0
    %v461 = vsel %vm445, 1, 0
    %v462 = vsel %vm446, 1, 0
    %v463 = vsel %vm447, 1, 0
    %v464 = vsel %vm448, 1, 0
    %v465 = vcvt.s32.f32 %v449
    %v466 = vcvt.s32.f32 %v450
    %v467 = vcvt.s32.f32 %v451
    %v468 = vcvt.s32.f32 %v452
    %v469 = vcvt.s32.f32 %v453
    %v470 = vcvt.s32.f32 %v454
    %v471 = vcvt.s32.f32 %v455
    %v472 = vcvt.s32.f32 %v456
    %v473 = vcvt.s32.f32 %v457
    %v474 = vcvt.s32.f32 %v458
    %v475 = vcvt.s32.f32 %v459
    %v476 = vcvt.s32.f32 %v460
    %v477 = vcvt.s32.f32 %v461
    %v478 = vcvt.s32.f32 %v462
    %v479 = vcvt.s32.f32 %v463
    %v480 = vcvt.s32.f32 %v464
    %483 = vrot.lane.b32.xlu0 %v195, 64
    %v484 = vpop.permute.xlu0 %483
    %485 = vrot.lane.b32.xlu0 %v200, 64
    %v486 = vpop.permute.xlu0 %485
    %v490 = vsel %vm219, %v465, 0
    %v493 = vsel %vm219, %v466, 0
    %v496 = vsel %vm219, %v467, 0
    %v499 = vsel %vm219, %v468, 0
    %v502 = vsel %vm219, %v469, 0
    %v505 = vsel %vm219, %v470, 0
    %v508 = vsel %vm219, %v471, 0
    %v511 = vsel %vm219, %v472, 0
    %513 = vmatprep.subr.mxu0 0.0
    %514 = vmatpush1.msra.mxu0 0.0
    %515 = vmatprep.subr.mxu0 0.0
    %516 = vmatpush1.msra.mxu0 0.0
    %517 = vmatprep.subr.mxu0 0.0
    %518 = vmatpush1.msra.mxu0 0.0
    %519 = vmatprep.subr.mxu0 0.0
    %520 = vmatpush1.msra.mxu0 0.0
    %521 = vmatprep.subr.mxu0 0.0
    %522 = vmatpush1.msra.mxu0 0.0
    %523 = vmatprep.subr.mxu0 0.0
    %524 = vmatpush1.msra.mxu0 0.0
    %525 = vmatprep.subr.mxu0 0.0
    %526 = vmatpush1.msra.mxu0 0.0
    %527 = vmatprep.subr.mxu0 0.0
    %528 = vmatpush1.msra.mxu0 0.0
    %529 = vmatprep.subr.mxu0 0.0
    %530 = vmatpush1.msra.mxu0 0.0
    %531 = vmatprep.subr.mxu0 0.0
    %532 = vmatpush1.msra.mxu0 0.0
    %533 = vmatprep.subr.mxu0 0.0
    %534 = vmatpush1.msra.mxu0 0.0
    %535 = vmatprep.subr.mxu0 0.0
    %536 = vmatpush1.msra.mxu0 0.0
    %537 = vmatprep.subr.mxu0 0.0
    %538 = vmatpush1.msra.mxu0 0.0
    %539 = vmatprep.subr.mxu0 0.0
    %540 = vmatpush1.msra.mxu0 0.0
    %541 = vmatprep.subr.mxu0 0.0
    %542 = vmatpush1.msra.mxu0 %v486
    %543 = vmatprep.subr.mxu0 0.0
    %544 = vmatpush1.msra.mxu0 %v484
    %545 = vmatprep.subr.mxu0 0.0
    %546 = vmatpush2.msra.mxu0 0.0
    %547 = vmatprep.subr.mxu0 0.0
    %548 = vmatpush2.msra.mxu0 0.0
    %549 = vmatprep.subr.mxu0 0.0
    %550 = vmatpush2.msra.mxu0 0.0
    %551 = vmatprep.subr.mxu0 0.0
    %552 = vmatpush2.msra.mxu0 0.0
    %553 = vmatprep.subr.mxu0 0.0
    %554 = vmatpush2.msra.mxu0 0.0
    %555 = vmatprep.subr.mxu0 0.0
    %556 = vmatpush2.msra.mxu0 0.0
    %557 = vmatprep.subr.mxu0 0.0
    %558 = vmatpush2.msra.mxu0 0.0
    %559 = vmatprep.subr.mxu0 0.0
    %560 = vmatpush2.msra.mxu0 0.0
    %561 = vmatprep.subr.mxu0 0.0
    %562 = vmatpush2.msra.mxu0 0.0
    %563 = vmatprep.subr.mxu0 0.0
    %564 = vmatpush2.msra.mxu0 0.0
    %565 = vmatprep.subr.mxu0 0.0
    %566 = vmatpush2.msra.mxu0 0.0
    %567 = vmatprep.subr.mxu0 0.0
    %568 = vmatpush2.msra.mxu0 0.0
    %569 = vmatprep.subr.mxu0 0.0
    %570 = vmatpush2.msra.mxu0 0.0
    %571 = vmatprep.subr.mxu0 0.0
    %572 = vmatpush2.msra.mxu0 0.0
    %573 = vmatprep.subr.mxu0 0.0
    %574 = vmatpush2.msra.mxu0 0.0
    %575 = vmatprep.subr.mxu0 0.0
    %576 = vmatpush2.msra.mxu0 0.0
    %577 = vmatprep.mubr.f32.mxu0 0.0
    %578 = vmatmul.mubr.f32.gmra.mxu0 %v490
    %v579 = vpop.f32.mrf.mxu0
    %v580 = vadd.f32 0.0, %v579
    %v581 = vpop.f32.mrf.mxu0
    %582 = vmatprep.mubr.f32.mxu0 0.0
    %583 = vmatmul.mubr.f32.gmra.mxu0 %v493
    %v584 = vpop.f32.mrf.mxu0
    %v585 = vadd.f32 0.0, %v584
    %v586 = vpop.f32.mrf.mxu0
    %587 = vmatprep.mubr.f32.mxu0 0.0
    %588 = vmatmul.mubr.f32.gmra.mxu0 %v496
    %v589 = vpop.f32.mrf.mxu0
    %v590 = vadd.f32 0.0, %v589
    %v591 = vpop.f32.mrf.mxu0
    %592 = vmatprep.mubr.f32.mxu0 0.0
    %593 = vmatmul.mubr.f32.gmra.mxu0 %v499
    %v594 = vpop.f32.mrf.mxu0
    %v595 = vadd.f32 0.0, %v594
    %v596 = vpop.f32.mrf.mxu0
    %597 = vmatprep.mubr.f32.mxu0 0.0
    %598 = vmatmul.mubr.f32.gmra.mxu0 %v502
    %v599 = vpop.f32.mrf.mxu0
    %v600 = vadd.f32 0.0, %v599
    %v601 = vpop.f32.mrf.mxu0
    %602 = vmatprep.mubr.f32.mxu0 0.0
    %603 = vmatmul.mubr.f32.gmra.mxu0 %v505
    %v604 = vpop.f32.mrf.mxu0
    %v605 = vadd.f32 0.0, %v604
    %v606 = vpop.f32.mrf.mxu0
    %607 = vmatprep.mubr.f32.mxu0 0.0
    %608 = vmatmul.mubr.f32.gmra.mxu0 %v508
    %v609 = vpop.f32.mrf.mxu0
    %v610 = vadd.f32 0.0, %v609
    %v611 = vpop.f32.mrf.mxu0
    %612 = vmatprep.mubr.f32.mxu0 0.0
    %613 = vmatmul.mubr.f32.gmra.mxu0 %v511
    %v614 = vpop.f32.mrf.mxu0
    %v615 = vadd.f32 0.0, %v614
    %v616 = vpop.f32.mrf.mxu0
    %617 = vdwg.mxu0
    %620 = vrot.lane.b32.xlu0 %v205, 64
    %v621 = vpop.permute.xlu0 %620
    %622 = vrot.lane.b32.xlu0 %v210, 64
    %v623 = vpop.permute.xlu0 %622
    %v627 = vsel %vm219, %v473, 0
    %v630 = vsel %vm219, %v474, 0
    %v633 = vsel %vm219, %v475, 0
    %v636 = vsel %vm219, %v476, 0
    %v639 = vsel %vm219, %v477, 0
    %v642 = vsel %vm219, %v478, 0
    %v645 = vsel %vm219, %v479, 0
    %v648 = vsel %vm219, %v480, 0
    %650 = vmatprep.subr.mxu0 0.0
    %651 = vmatpush1.msra.mxu0 0.0
    %652 = vmatprep.subr.mxu0 0.0
    %653 = vmatpush1.msra.mxu0 0.0
    %654 = vmatprep.subr.mxu0 0.0
    %655 = vmatpush1.msra.mxu0 0.0
    %656 = vmatprep.subr.mxu0 0.0
    %657 = vmatpush1.msra.mxu0 0.0
    %658 = vmatprep.subr.mxu0 0.0
    %659 = vmatpush1.msra.mxu0 0.0
    %660 = vmatprep.subr.mxu0 0.0
    %661 = vmatpush1.msra.mxu0 0.0
    %662 = vmatprep.subr.mxu0 0.0
    %663 = vmatpush1.msra.mxu0 0.0
    %664 = vmatprep.subr.mxu0 0.0
    %665 = vmatpush1.msra.mxu0 0.0
    %666 = vmatprep.subr.mxu0 0.0
    %667 = vmatpush1.msra.mxu0 0.0
    %668 = vmatprep.subr.mxu0 0.0
    %669 = vmatpush1.msra.mxu0 0.0
    %670 = vmatprep.subr.mxu0 0.0
    %671 = vmatpush1.msra.mxu0 0.0
    %672 = vmatprep.subr.mxu0 0.0
    %673 = vmatpush1.msra.mxu0 0.0
    %674 = vmatprep.subr.mxu0 0.0
    %675 = vmatpush1.msra.mxu0 0.0
    %676 = vmatprep.subr.mxu0 0.0
    %677 = vmatpush1.msra.mxu0 0.0
    %678 = vmatprep.subr.mxu0 0.0
    %679 = vmatpush1.msra.mxu0 %v623
    %680 = vmatprep.subr.mxu0 0.0
    %681 = vmatpush1.msra.mxu0 %v621
    %682 = vmatprep.subr.mxu0 0.0
    %683 = vmatpush2.msra.mxu0 0.0
    %684 = vmatprep.subr.mxu0 0.0
    %685 = vmatpush2.msra.mxu0 0.0
    %686 = vmatprep.subr.mxu0 0.0
    %687 = vmatpush2.msra.mxu0 0.0
    %688 = vmatprep.subr.mxu0 0.0
    %689 = vmatpush2.msra.mxu0 0.0
    %690 = vmatprep.subr.mxu0 0.0
    %691 = vmatpush2.msra.mxu0 0.0
    %692 = vmatprep.subr.mxu0 0.0
    %693 = vmatpush2.msra.mxu0 0.0
    %694 = vmatprep.subr.mxu0 0.0
    %695 = vmatpush2.msra.mxu0 0.0
    %696 = vmatprep.subr.mxu0 0.0
    %697 = vmatpush2.msra.mxu0 0.0
    %698 = vmatprep.subr.mxu0 0.0
    %699 = vmatpush2.msra.mxu0 0.0
    %700 = vmatprep.subr.mxu0 0.0
    %701 = vmatpush2.msra.mxu0 0.0
    %702 = vmatprep.subr.mxu0 0.0
    %703 = vmatpush2.msra.mxu0 0.0
    %704 = vmatprep.subr.mxu0 0.0
    %705 = vmatpush2.msra.mxu0 0.0
    %706 = vmatprep.subr.mxu0 0.0
    %707 = vmatpush2.msra.mxu0 0.0
    %708 = vmatprep.subr.mxu0 0.0
    %709 = vmatpush2.msra.mxu0 0.0
    %710 = vmatprep.subr.mxu0 0.0
    %711 = vmatpush2.msra.mxu0 0.0
    %712 = vmatprep.subr.mxu0 0.0
    %713 = vmatpush2.msra.mxu0 0.0
    %714 = vmatprep.mubr.f32.mxu0 0.0
    %715 = vmatmul.mubr.f32.gmra.mxu0 %v627
    %v716 = vpop.f32.mrf.mxu0
    %v717 = vadd.f32 0.0, %v716
    %v718 = vpop.f32.mrf.mxu0
    %719 = vmatprep.mubr.f32.mxu0 0.0
    %720 = vmatmul.mubr.f32.gmra.mxu0 %v630
    %v721 = vpop.f32.mrf.mxu0
    %v722 = vadd.f32 0.0, %v721
    %v723 = vpop.f32.mrf.mxu0
    %724 = vmatprep.mubr.f32.mxu0 0.0
    %725 = vmatmul.mubr.f32.gmra.mxu0 %v633
    %v726 = vpop.f32.mrf.mxu0
    %v727 = vadd.f32 0.0, %v726
    %v728 = vpop.f32.mrf.mxu0
    %729 = vmatprep.mubr.f32.mxu0 0.0
    %730 = vmatmul.mubr.f32.gmra.mxu0 %v636
    %v731 = vpop.f32.mrf.mxu0
    %v732 = vadd.f32 0.0, %v731
    %v733 = vpop.f32.mrf.mxu0
    %734 = vmatprep.mubr.f32.mxu0 0.0
    %735 = vmatmul.mubr.f32.gmra.mxu0 %v639
    %v736 = vpop.f32.mrf.mxu0
    %v737 = vadd.f32 0.0, %v736
    %v738 = vpop.f32.mrf.mxu0
    %739 = vmatprep.mubr.f32.mxu0 0.0
    %740 = vmatmul.mubr.f32.gmra.mxu0 %v642
    %v741 = vpop.f32.mrf.mxu0
    %v742 = vadd.f32 0.0, %v741
    %v743 = vpop.f32.mrf.mxu0
    %744 = vmatprep.mubr.f32.mxu0 0.0
    %745 = vmatmul.mubr.f32.gmra.mxu0 %v645
    %v746 = vpop.f32.mrf.mxu0
    %v747 = vadd.f32 0.0, %v746
    %v748 = vpop.f32.mrf.mxu0
    %749 = vmatprep.mubr.f32.mxu0 0.0
    %750 = vmatmul.mubr.f32.gmra.mxu0 %v648
    %v751 = vpop.f32.mrf.mxu0
    %v752 = vadd.f32 0.0, %v751
    %v753 = vpop.f32.mrf.mxu0
    %754 = vdwg.mxu0
    %755 = vmatprep.subr.mxu0 0.0
    %756 = vmatpush1.msra.mxu0 0.0
    %757 = vmatprep.subr.mxu0 0.0
    %758 = vmatpush1.msra.mxu0 0.0
    %759 = vmatprep.subr.mxu0 0.0
    %760 = vmatpush1.msra.mxu0 0.0
    %761 = vmatprep.subr.mxu0 0.0
    %762 = vmatpush1.msra.mxu0 0.0
    %763 = vmatprep.subr.mxu0 0.0
    %764 = vmatpush1.msra.mxu0 0.0
    %765 = vmatprep.subr.mxu0 0.0
    %766 = vmatpush1.msra.mxu0 0.0
    %767 = vmatprep.subr.mxu0 0.0
    %768 = vmatpush1.msra.mxu0 0.0
    %769 = vmatprep.subr.mxu0 0.0
    %770 = vmatpush1.msra.mxu0 0.0
    %771 = vmatprep.subr.mxu0 0.0
    %772 = vmatpush1.msra.mxu0 0.0
    %773 = vmatprep.subr.mxu0 0.0
    %774 = vmatpush1.msra.mxu0 0.0
    %775 = vmatprep.subr.mxu0 0.0
    %776 = vmatpush1.msra.mxu0 0.0
    %777 = vmatprep.subr.mxu0 0.0
    %778 = vmatpush1.msra.mxu0 0.0
    %779 = vmatprep.subr.mxu0 0.0
    %780 = vmatpush1.msra.mxu0 0.0
    %781 = vmatprep.subr.mxu0 0.0
    %782 = vmatpush1.msra.mxu0 0.0
    %783 = vmatprep.subr.mxu0 0.0
    %784 = vmatpush1.msra.mxu0 %v304
    %785 = vmatprep.subr.mxu0 0.0
    %786 = vmatpush1.msra.mxu0 %v299
    %787 = vmatprep.subr.mxu0 0.0
    %788 = vmatpush2.msra.mxu0 0.0
    %789 = vmatprep.subr.mxu0 0.0
    %790 = vmatpush2.msra.mxu0 0.0
    %791 = vmatprep.subr.mxu0 0.0
    %792 = vmatpush2.msra.mxu0 0.0
    %793 = vmatprep.subr.mxu0 0.0
    %794 = vmatpush2.msra.mxu0 0.0
    %795 = vmatprep.subr.mxu0 0.0
    %796 = vmatpush2.msra.mxu0 0.0
    %797 = vmatprep.subr.mxu0 0.0
    %798 = vmatpush2.msra.mxu0 0.0
    %799 = vmatprep.subr.mxu0 0.0
    %800 = vmatpush2.msra.mxu0 0.0
    %801 = vmatprep.subr.mxu0 0.0
    %802 = vmatpush2.msra.mxu0 0.0
    %803 = vmatprep.subr.mxu0 0.0
    %804 = vmatpush2.msra.mxu0 0.0
    %805 = vmatprep.subr.mxu0 0.0
    %806 = vmatpush2.msra.mxu0 0.0
    %807 = vmatprep.subr.mxu0 0.0
    %808 = vmatpush2.msra.mxu0 0.0
    %809 = vmatprep.subr.mxu0 0.0
    %810 = vmatpush2.msra.mxu0 0.0
    %811 = vmatprep.subr.mxu0 0.0
    %812 = vmatpush2.msra.mxu0 0.0
    %813 = vmatprep.subr.mxu0 0.0
    %814 = vmatpush2.msra.mxu0 0.0
    %815 = vmatprep.subr.mxu0 0.0
    %816 = vmatpush2.msra.mxu0 0.0
    %817 = vmatprep.subr.mxu0 0.0
    %818 = vmatpush2.msra.mxu0 0.0
    %819 = vmatprep.mubr.f32.mxu0 0.0
    %820 = vmatmul.mubr.f32.gmra.mxu0 %v490
    %v821 = vpop.f32.mrf.mxu0
    %v822 = vadd.f32 0.0, %v821
    %v823 = vpop.f32.mrf.mxu0
    %824 = vmatprep.mubr.f32.mxu0 0.0
    %825 = vmatmul.mubr.f32.gmra.mxu0 %v493
    %v826 = vpop.f32.mrf.mxu0
    %v827 = vadd.f32 0.0, %v826
    %v828 = vpop.f32.mrf.mxu0
    %829 = vmatprep.mubr.f32.mxu0 0.0
    %830 = vmatmul.mubr.f32.gmra.mxu0 %v496
    %v831 = vpop.f32.mrf.mxu0
    %v832 = vadd.f32 0.0, %v831
    %v833 = vpop.f32.mrf.mxu0
    %834 = vmatprep.mubr.f32.mxu0 0.0
    %835 = vmatmul.mubr.f32.gmra.mxu0 %v499
    %v836 = vpop.f32.mrf.mxu0
    %v837 = vadd.f32 0.0, %v836
    %v838 = vpop.f32.mrf.mxu0
    %839 = vmatprep.mubr.f32.mxu0 0.0
    %840 = vmatmul.mubr.f32.gmra.mxu0 %v502
    %v841 = vpop.f32.mrf.mxu0
    %v842 = vadd.f32 0.0, %v841
    %v843 = vpop.f32.mrf.mxu0
    %844 = vmatprep.mubr.f32.mxu0 0.0
    %845 = vmatmul.mubr.f32.gmra.mxu0 %v505
    %v846 = vpop.f32.mrf.mxu0
    %v847 = vadd.f32 0.0, %v846
    %v848 = vpop.f32.mrf.mxu0
    %849 = vmatprep.mubr.f32.mxu0 0.0
    %850 = vmatmul.mubr.f32.gmra.mxu0 %v508
    %v851 = vpop.f32.mrf.mxu0
    %v852 = vadd.f32 0.0, %v851
    %v853 = vpop.f32.mrf.mxu0
    %854 = vmatprep.mubr.f32.mxu0 0.0
    %855 = vmatmul.mubr.f32.gmra.mxu0 %v511
    %v856 = vpop.f32.mrf.mxu0
    %v857 = vadd.f32 0.0, %v856
    %v858 = vpop.f32.mrf.mxu0
    %859 = vdwg.mxu0
    %860 = vmatprep.subr.mxu0 0.0
    %861 = vmatpush1.msra.mxu0 0.0
    %862 = vmatprep.subr.mxu0 0.0
    %863 = vmatpush1.msra.mxu0 0.0
    %864 = vmatprep.subr.mxu0 0.0
    %865 = vmatpush1.msra.mxu0 0.0
    %866 = vmatprep.subr.mxu0 0.0
    %867 = vmatpush1.msra.mxu0 0.0
    %868 = vmatprep.subr.mxu0 0.0
    %869 = vmatpush1.msra.mxu0 0.0
    %870 = vmatprep.subr.mxu0 0.0
    %871 = vmatpush1.msra.mxu0 0.0
    %872 = vmatprep.subr.mxu0 0.0
    %873 = vmatpush1.msra.mxu0 0.0
    %874 = vmatprep.subr.mxu0 0.0
    %875 = vmatpush1.msra.mxu0 0.0
    %876 = vmatprep.subr.mxu0 0.0
    %877 = vmatpush1.msra.mxu0 0.0
    %878 = vmatprep.subr.mxu0 0.0
    %879 = vmatpush1.msra.mxu0 0.0
    %880 = vmatprep.subr.mxu0 0.0
    %881 = vmatpush1.msra.mxu0 0.0
    %882 = vmatprep.subr.mxu0 0.0
    %883 = vmatpush1.msra.mxu0 0.0
    %884 = vmatprep.subr.mxu0 0.0
    %885 = vmatpush1.msra.mxu0 0.0
    %886 = vmatprep.subr.mxu0 0.0
    %887 = vmatpush1.msra.mxu0 0.0
    %888 = vmatprep.subr.mxu0 0.0
    %889 = vmatpush1.msra.mxu0 %v314
    %890 = vmatprep.subr.mxu0 0.0
    %891 = vmatpush1.msra.mxu0 %v309
    %892 = vmatprep.subr.mxu0 0.0
    %893 = vmatpush2.msra.mxu0 0.0
    %894 = vmatprep.subr.mxu0 0.0
    %895 = vmatpush2.msra.mxu0 0.0
    %896 = vmatprep.subr.mxu0 0.0
    %897 = vmatpush2.msra.mxu0 0.0
    %898 = vmatprep.subr.mxu0 0.0
    %899 = vmatpush2.msra.mxu0 0.0
    %900 = vmatprep.subr.mxu0 0.0
    %901 = vmatpush2.msra.mxu0 0.0
    %902 = vmatprep.subr.mxu0 0.0
    %903 = vmatpush2.msra.mxu0 0.0
    %904 = vmatprep.subr.mxu0 0.0
    %905 = vmatpush2.msra.mxu0 0.0
    %906 = vmatprep.subr.mxu0 0.0
    %907 = vmatpush2.msra.mxu0 0.0
    %908 = vmatprep.subr.mxu0 0.0
    %909 = vmatpush2.msra.mxu0 0.0
    %910 = vmatprep.subr.mxu0 0.0
    %911 = vmatpush2.msra.mxu0 0.0
    %912 = vmatprep.subr.mxu0 0.0
    %913 = vmatpush2.msra.mxu0 0.0
    %914 = vmatprep.subr.mxu0 0.0
    %915 = vmatpush2.msra.mxu0 0.0
    %916 = vmatprep.subr.mxu0 0.0
    %917 = vmatpush2.msra.mxu0 0.0
    %918 = vmatprep.subr.mxu0 0.0
    %919 = vmatpush2.msra.mxu0 0.0
    %920 = vmatprep.subr.mxu0 0.0
    %921 = vmatpush2.msra.mxu0 0.0
    %922 = vmatprep.subr.mxu0 0.0
    %923 = vmatpush2.msra.mxu0 0.0
    %924 = vmatprep.mubr.f32.mxu0 0.0
    %925 = vmatmul.mubr.f32.gmra.mxu0 %v627
    %v926 = vpop.f32.mrf.mxu0
    %v927 = vadd.f32 0.0, %v926
    %v928 = vpop.f32.mrf.mxu0
    %929 = vmatprep.mubr.f32.mxu0 0.0
    %930 = vmatmul.mubr.f32.gmra.mxu0 %v630
    %v931 = vpop.f32.mrf.mxu0
    %v932 = vadd.f32 0.0, %v931
    %v933 = vpop.f32.mrf.mxu0
    %934 = vmatprep.mubr.f32.mxu0 0.0
    %935 = vmatmul.mubr.f32.gmra.mxu0 %v633
    %v936 = vpop.f32.mrf.mxu0
    %v937 = vadd.f32 0.0, %v936
    %v938 = vpop.f32.mrf.mxu0
    %939 = vmatprep.mubr.f32.mxu0 0.0
    %940 = vmatmul.mubr.f32.gmra.mxu0 %v636
    %v941 = vpop.f32.mrf.mxu0
    %v942 = vadd.f32 0.0, %v941
    %v943 = vpop.f32.mrf.mxu0
    %944 = vmatprep.mubr.f32.mxu0 0.0
    %945 = vmatmul.mubr.f32.gmra.mxu0 %v639
    %v946 = vpop.f32.mrf.mxu0
    %v947 = vadd.f32 0.0, %v946
    %v948 = vpop.f32.mrf.mxu0
    %949 = vmatprep.mubr.f32.mxu0 0.0
    %950 = vmatmul.mubr.f32.gmra.mxu0 %v642
    %v951 = vpop.f32.mrf.mxu0
    %v952 = vadd.f32 0.0, %v951
    %v953 = vpop.f32.mrf.mxu0
    %954 = vmatprep.mubr.f32.mxu0 0.0
    %955 = vmatmul.mubr.f32.gmra.mxu0 %v645
    %v956 = vpop.f32.mrf.mxu0
    %v957 = vadd.f32 0.0, %v956
    %v958 = vpop.f32.mrf.mxu0
    %959 = vmatprep.mubr.f32.mxu0 0.0
    %960 = vmatmul.mubr.f32.gmra.mxu0 %v648
    %v961 = vpop.f32.mrf.mxu0
    %v962 = vadd.f32 0.0, %v961
    %v963 = vpop.f32.mrf.mxu0
    %964 = vdwg.mxu0
    %v967 = vcombine.high %v185, %v185
    %v969 = vunpack.c.l.s4 1966171168
    %v970 = vunpack.c.0.s8 %v969
    %v971 = vlaneseq
    %v972 = vshrl.u32 %v971, 7
    %v973 = vsub.s32 %v970, %v972
    %v974 = vrot.slane %v185, %v973
    %v976 = vunpack.c.l.s4 1966171168
    %v977 = vunpack.c.0.s8 %v976
    %v978 = vlaneseq
    %v979 = vshrl.u32 %v978, 7
    %v980 = vsub.s32 %v977, %v979
    %v981 = vrot.slane %v967, %v980
    %v982 = vcombine.high %v974, %v974
    %v983 = vcombine.high %v981, %v981
    %v985 = vunpack.c.l.s4 1966171168
    %v986 = vunpack.c.0.s8 %v985
    %v987 = vlaneseq
    %v988 = vshrl.u32 %v987, 7
    %v989 = vsub.s32 %v986, %v988
    %v990 = vrot.slane %v974, %v989
    %v992 = vunpack.c.l.s4 1966171168
    %v993 = vunpack.c.0.s8 %v992
    %v994 = vlaneseq
    %v995 = vshrl.u32 %v994, 7
    %v996 = vsub.s32 %v993, %v995
    %v997 = vrot.slane %v981, %v996
    %v999 = vunpack.c.l.s4 1966171168
    %v1000 = vunpack.c.0.s8 %v999
    %v1001 = vlaneseq
    %v1002 = vshrl.u32 %v1001, 7
    %v1003 = vsub.s32 %v1000, %v1002
    %v1004 = vrot.slane %v982, %v1003
    %v1006 = vunpack.c.l.s4 1966171168
    %v1007 = vunpack.c.0.s8 %v1006
    %v1008 = vlaneseq
    %v1009 = vshrl.u32 %v1008, 7
    %v1010 = vsub.s32 %v1007, %v1009
    %v1011 = vrot.slane %v983, %v1010
    %v1012 = vcombine.high %v990, %v990
    %v1013 = vcombine.high %v997, %v997
    %v1014 = vcombine.high %v1004, %v1004
    %v1015 = vcombine.high %v1011, %v1011
    %v1016 = vcombine.high %v190, %v190
    %v1018 = vunpack.c.l.s4 1966171168
    %v1019 = vunpack.c.0.s8 %v1018
    %v1020 = vlaneseq
    %v1021 = vshrl.u32 %v1020, 7
    %v1022 = vsub.s32 %v1019, %v1021
    %v1023 = vrot.slane %v190, %v1022
    %v1025 = vunpack.c.l.s4 1966171168
    %v1026 = vunpack.c.0.s8 %v1025
    %v1027 = vlaneseq
    %v1028 = vshrl.u32 %v1027, 7
    %v1029 = vsub.s32 %v1026, %v1028
    %v1030 = vrot.slane %v1016, %v1029
    %v1031 = vcombine.high %v1023, %v1023
    %v1032 = vcombine.high %v1030, %v1030
    %v1034 = vunpack.c.l.s4 1966171168
    %v1035 = vunpack.c.0.s8 %v1034
    %v1036 = vlaneseq
    %v1037 = vshrl.u32 %v1036, 7
    %v1038 = vsub.s32 %v1035, %v1037
    %v1039 = vrot.slane %v1023, %v1038
    %v1041 = vunpack.c.l.s4 1966171168
    %v1042 = vunpack.c.0.s8 %v1041
    %v1043 = vlaneseq
    %v1044 = vshrl.u32 %v1043, 7
    %v1045 = vsub.s32 %v1042, %v1044
    %v1046 = vrot.slane %v1030, %v1045
    %v1048 = vunpack.c.l.s4 1966171168
    %v1049 = vunpack.c.0.s8 %v1048
    %v1050 = vlaneseq
    %v1051 = vshrl.u32 %v1050, 7
    %v1052 = vsub.s32 %v1049, %v1051
    %v1053 = vrot.slane %v1031, %v1052
    %v1055 = vunpack.c.l.s4 1966171168
    %v1056 = vunpack.c.0.s8 %v1055
    %v1057 = vlaneseq
    %v1058 = vshrl.u32 %v1057, 7
    %v1059 = vsub.s32 %v1056, %v1058
    %v1060 = vrot.slane %v1032, %v1059
    %v1061 = vcombine.high %v1039, %v1039
    %v1062 = vcombine.high %v1046, %v1046
    %v1063 = vcombine.high %v1053, %v1053
    %v1064 = vcombine.high %v1060, %v1060
    %v1065 = vlaneseq
    %v1066 = vshrl.u32 %v1065, 7
    %v1067 = vsub.s32 0, %v1066
    %v1068 = vrot.slane %v990, %v1067
    %v1069 = vlaneseq
    %v1070 = vshrl.u32 %v1069, 7
    %v1071 = vsub.s32 0, %v1070
    %v1072 = vrot.slane %v1004, %v1071
    %v1073 = vlaneseq
    %v1074 = vshrl.u32 %v1073, 7
    %v1075 = vsub.s32 0, %v1074
    %v1076 = vrot.slane %v1012, %v1075
    %v1077 = vlaneseq
    %v1078 = vshrl.u32 %v1077, 7
    %v1079 = vsub.s32 0, %v1078
    %v1080 = vrot.slane %v1014, %v1079
    %v1081 = vlaneseq
    %v1082 = vshrl.u32 %v1081, 7
    %v1083 = vsub.s32 0, %v1082
    %v1084 = vrot.slane %v997, %v1083
    %v1085 = vlaneseq
    %v1086 = vshrl.u32 %v1085, 7
    %v1087 = vsub.s32 0, %v1086
    %v1088 = vrot.slane %v1011, %v1087
    %v1089 = vlaneseq
    %v1090 = vshrl.u32 %v1089, 7
    %v1091 = vsub.s32 0, %v1090
    %v1092 = vrot.slane %v1013, %v1091
    %v1093 = vlaneseq
    %v1094 = vshrl.u32 %v1093, 7
    %v1095 = vsub.s32 0, %v1094
    %v1096 = vrot.slane %v1015, %v1095
    %v1097 = vlaneseq
    %v1098 = vshrl.u32 %v1097, 7
    %v1099 = vsub.s32 0, %v1098
    %v1100 = vrot.slane %v1039, %v1099
    %v1101 = vlaneseq
    %v1102 = vshrl.u32 %v1101, 7
    %v1103 = vsub.s32 0, %v1102
    %v1104 = vrot.slane %v1053, %v1103
    %v1105 = vlaneseq
    %v1106 = vshrl.u32 %v1105, 7
    %v1107 = vsub.s32 0, %v1106
    %v1108 = vrot.slane %v1061, %v1107
    %v1109 = vlaneseq
    %v1110 = vshrl.u32 %v1109, 7
    %v1111 = vsub.s32 0, %v1110
    %v1112 = vrot.slane %v1063, %v1111
    %v1113 = vlaneseq
    %v1114 = vshrl.u32 %v1113, 7
    %v1115 = vsub.s32 0, %v1114
    %v1116 = vrot.slane %v1046, %v1115
    %v1117 = vlaneseq
    %v1118 = vshrl.u32 %v1117, 7
    %v1119 = vsub.s32 0, %v1118
    %v1120 = vrot.slane %v1060, %v1119
    %v1121 = vlaneseq
    %v1122 = vshrl.u32 %v1121, 7
    %v1123 = vsub.s32 0, %v1122
    %v1124 = vrot.slane %v1062, %v1123
    %v1125 = vlaneseq
    %v1126 = vshrl.u32 %v1125, 7
    %v1127 = vsub.s32 0, %v1126
    %v1128 = vrot.slane %v1064, %v1127
    %v1145 = vmul.f32 %v1068, %v580
    %v1146 = vmul.f32 %v1072, %v585
    %v1147 = vmul.f32 %v1076, %v590
    %v1148 = vmul.f32 %v1080, %v595
    %v1149 = vmul.f32 %v1084, %v600
    %v1150 = vmul.f32 %v1088, %v605
    %v1151 = vmul.f32 %v1092, %v610
    %v1152 = vmul.f32 %v1096, %v615
    %v1153 = vmul.f32 %v1100, %v717
    %v1154 = vmul.f32 %v1104, %v722
    %v1155 = vmul.f32 %v1108, %v727
    %v1156 = vmul.f32 %v1112, %v732
    %v1157 = vmul.f32 %v1116, %v737
    %v1158 = vmul.f32 %v1120, %v742
    %v1159 = vmul.f32 %v1124, %v747
    %v1160 = vmul.f32 %v1128, %v752
    %v1161 = vsel %vm99, %v1145, 0.0
    %1162 = vadd.xlane.f32.xlu0 %v1161
    %v1163 = vpop.xlane.xlu0 %1162
    %v1164 = vsel %vm99, %v1146, 0.0
    %1165 = vadd.xlane.f32.xlu0 %v1164
    %v1166 = vpop.xlane.xlu0 %1165
    %v1167 = vsel %vm99, %v1147, 0.0
    %1168 = vadd.xlane.f32.xlu0 %v1167
    %v1169 = vpop.xlane.xlu0 %1168
    %v1170 = vsel %vm99, %v1148, 0.0
    %1171 = vadd.xlane.f32.xlu0 %v1170
    %v1172 = vpop.xlane.xlu0 %1171
    %v1173 = vsel %vm99, %v1149, 0.0
    %1174 = vadd.xlane.f32.xlu0 %v1173
    %v1175 = vpop.xlane.xlu0 %1174
    %v1176 = vsel %vm99, %v1150, 0.0
    %1177 = vadd.xlane.f32.xlu0 %v1176
    %v1178 = vpop.xlane.xlu0 %1177
    %v1179 = vsel %vm99, %v1151, 0.0
    %1180 = vadd.xlane.f32.xlu0 %v1179
    %v1181 = vpop.xlane.xlu0 %1180
    %v1182 = vsel %vm99, %v1152, 0.0
    %1183 = vadd.xlane.f32.xlu0 %v1182
    %v1184 = vpop.xlane.xlu0 %1183
    %v1185 = vsel %vm99, %v1153, 0.0
    %1186 = vadd.xlane.f32.xlu0 %v1185
    %v1187 = vpop.xlane.xlu0 %1186
    %v1188 = vsel %vm99, %v1154, 0.0
    %1189 = vadd.xlane.f32.xlu0 %v1188
    %v1190 = vpop.xlane.xlu0 %1189
    %v1191 = vsel %vm99, %v1155, 0.0
    %1192 = vadd.xlane.f32.xlu0 %v1191
    %v1193 = vpop.xlane.xlu0 %1192
    %v1194 = vsel %vm99, %v1156, 0.0
    %1195 = vadd.xlane.f32.xlu0 %v1194
    %v1196 = vpop.xlane.xlu0 %1195
    %v1197 = vsel %vm99, %v1157, 0.0
    %1198 = vadd.xlane.f32.xlu0 %v1197
    %v1199 = vpop.xlane.xlu0 %1198
    %v1200 = vsel %vm99, %v1158, 0.0
    %1201 = vadd.xlane.f32.xlu0 %v1200
    %v1202 = vpop.xlane.xlu0 %1201
    %v1203 = vsel %vm99, %v1159, 0.0
    %1204 = vadd.xlane.f32.xlu0 %v1203
    %v1205 = vpop.xlane.xlu0 %1204
    %v1206 = vsel %vm99, %v1160, 0.0
    %1207 = vadd.xlane.f32.xlu0 %v1206
    %v1208 = vpop.xlane.xlu0 %1207
    %vm1209 = vcmp.eq.s32.totalorder %v317, 16
    %vm1210 = vcmp.eq.s32.totalorder %v318, 16
    %v1227 = vlaneseq
    %v1228 = vshrl.u32 %v1227, 7
    %v1229 = vsub.s32 %v320, %v1228
    %v1230 = vrot.slane %v1163, %v1229
    %v1231 = vlaneseq
    %v1232 = vshrl.u32 %v1231, 7
    %v1233 = vsub.s32 %v320, %v1232
    %v1234 = vrot.slane %v1166, %v1233
    %v1235 = vlaneseq
    %v1236 = vshrl.u32 %v1235, 7
    %v1237 = vsub.s32 %v320, %v1236
    %v1238 = vrot.slane %v1169, %v1237
    %v1239 = vlaneseq
    %v1240 = vshrl.u32 %v1239, 7
    %v1241 = vsub.s32 %v320, %v1240
    %v1242 = vrot.slane %v1172, %v1241
    %v1243 = vlaneseq
    %v1244 = vshrl.u32 %v1243, 7
    %v1245 = vsub.s32 %v320, %v1244
    %v1246 = vrot.slane %v1175, %v1245
    %v1247 = vlaneseq
    %v1248 = vshrl.u32 %v1247, 7
    %v1249 = vsub.s32 %v320, %v1248
    %v1250 = vrot.slane %v1178, %v1249
    %v1251 = vlaneseq
    %v1252 = vshrl.u32 %v1251, 7
    %v1253 = vsub.s32 %v320, %v1252
    %v1254 = vrot.slane %v1181, %v1253
    %v1255 = vlaneseq
    %v1256 = vshrl.u32 %v1255, 7
    %v1257 = vsub.s32 %v320, %v1256
    %v1258 = vrot.slane %v1184, %v1257
    %v1259 = vlaneseq
    %v1260 = vshrl.u32 %v1259, 7
    %v1261 = vsub.s32 %v320, %v1260
    %v1262 = vrot.slane %v1187, %v1261
    %v1263 = vlaneseq
    %v1264 = vshrl.u32 %v1263, 7
    %v1265 = vsub.s32 %v320, %v1264
    %v1266 = vrot.slane %v1190, %v1265
    %v1267 = vlaneseq
    %v1268 = vshrl.u32 %v1267, 7
    %v1269 = vsub.s32 %v320, %v1268
    %v1270 = vrot.slane %v1193, %v1269
    %v1271 = vlaneseq
    %v1272 = vshrl.u32 %v1271, 7
    %v1273 = vsub.s32 %v320, %v1272
    %v1274 = vrot.slane %v1196, %v1273
    %v1275 = vlaneseq
    %v1276 = vshrl.u32 %v1275, 7
    %v1277 = vsub.s32 %v320, %v1276
    %v1278 = vrot.slane %v1199, %v1277
    %v1279 = vlaneseq
    %v1280 = vshrl.u32 %v1279, 7
    %v1281 = vsub.s32 %v320, %v1280
    %v1282 = vrot.slane %v1202, %v1281
    %v1283 = vlaneseq
    %v1284 = vshrl.u32 %v1283, 7
    %v1285 = vsub.s32 %v320, %v1284
    %v1286 = vrot.slane %v1205, %v1285
    %v1287 = vlaneseq
    %v1288 = vshrl.u32 %v1287, 7
    %v1289 = vsub.s32 %v320, %v1288
    %v1290 = vrot.slane %v1208, %v1289
    %vm1291 = vcmask 1041409
    %v1292 = vsel %vm1291, %v1234, %v1230
    %vm1293 = vcmask 1042434
    %v1294 = vsel %vm1293, %v1238, %v1292
    %vm1295 = vcmask 1043459
    %v1296 = vsel %vm1295, %v1242, %v1294
    %vm1297 = vcmask 1044484
    %v1298 = vsel %vm1297, %v1246, %v1296
    %vm1299 = vcmask 1045509
    %v1300 = vsel %vm1299, %v1250, %v1298
    %vm1301 = vcmask 1046534
    %v1302 = vsel %vm1301, %v1254, %v1300
    %vm1303 = vcmask 1047559
    %v1304 = vsel %vm1303, %v1258, %v1302
    %v1305 = vsel %vm1291, %v1266, %v1262
    %v1306 = vsel %vm1293, %v1270, %v1305
    %v1307 = vsel %vm1295, %v1274, %v1306
    %v1308 = vsel %vm1297, %v1278, %v1307
    %v1309 = vsel %vm1299, %v1282, %v1308
    %v1310 = vsel %vm1301, %v1286, %v1309
    %v1311 = vsel %vm1303, %v1290, %v1310
    %v1314 = vsel %vm1209, -1e+20, %v1304
    %v1315 = vsel %vm1210, -1e+20, %v1311
    %vm1316 = vcmask 64512
    %v1317 = vsel %vm1316, %v1314, -inf
    %1318 = vmax.xlane.f32.xlu0 %v1317
    %v1319 = vpop.xlane.xlu0 %1318
    %v1320 = vsel %vm1316, %v1315, -inf
    %1321 = vmax.xlane.f32.xlu0 %v1320
    %v1322 = vpop.xlane.xlu0 %1321
    %v1323 = vsub.f32 %v1314, %v1319
    %v1324 = vsub.f32 %v1315, %v1322
    %v1325 = vmul.f32 %v1323, 1.442695
    %v1326 = vpow.pop %v1325
    %v1327 = vmul.f32 %v1324, 1.442695
    %v1328 = vpow.pop %v1327
    %v1329 = vsel %vm1316, %v1326, 0.0
    %1330 = vadd.xlane.f32.xlu0 %v1329
    %v1331 = vpop.xlane.xlu0 %1330
    %v1332 = vsel %vm1316, %v1328, 0.0
    %1333 = vadd.xlane.f32.xlu0 %v1332
    %v1334 = vpop.xlane.xlu0 %1333
    %v1335 = vrcp.pop %v1331
    %v1336 = vmul.f32 %v1326, %v1335
    %v1337 = vrcp.pop %v1334
    %v1338 = vmul.f32 %v1328, %v1337
    %v1339 = vlaneseq
    %v1340 = vshrl.u32 %v1339, 7
    %v1341 = vsub.s32 0, %v1340
    %v1342 = vrot.slane %v1336, %v1341
    %1344 = vbcast.lane.b32.xlu0 %v1342, 256
    %v1345 = vpop.permute.xlu0 %1344
    %v1346 = vlaneseq
    %v1347 = vshrl.u32 %v1346, 7
    %v1348 = vsub.s32 1, %v1347
    %v1349 = vrot.slane %v1336, %v1348
    %1351 = vbcast.lane.b32.xlu0 %v1349, 256
    %v1352 = vpop.permute.xlu0 %1351
    %v1353 = vlaneseq
    %v1354 = vshrl.u32 %v1353, 7
    %v1355 = vsub.s32 2, %v1354
    %v1356 = vrot.slane %v1336, %v1355
    %1358 = vbcast.lane.b32.xlu0 %v1356, 256
    %v1359 = vpop.permute.xlu0 %1358
    %v1360 = vlaneseq
    %v1361 = vshrl.u32 %v1360, 7
    %v1362 = vsub.s32 3, %v1361
    %v1363 = vrot.slane %v1336, %v1362
    %1365 = vbcast.lane.b32.xlu0 %v1363, 256
    %v1366 = vpop.permute.xlu0 %1365
    %v1367 = vlaneseq
    %v1368 = vshrl.u32 %v1367, 7
    %v1369 = vsub.s32 4, %v1368
    %v1370 = vrot.slane %v1336, %v1369
    %1372 = vbcast.lane.b32.xlu0 %v1370, 256
    %v1373 = vpop.permute.xlu0 %1372
    %v1374 = vlaneseq
    %v1375 = vshrl.u32 %v1374, 7
    %v1376 = vsub.s32 5, %v1375
    %v1377 = vrot.slane %v1336, %v1376
    %1379 = vbcast.lane.b32.xlu0 %v1377, 256
    %v1380 = vpop.permute.xlu0 %1379
    %v1381 = vlaneseq
    %v1382 = vshrl.u32 %v1381, 7
    %v1383 = vsub.s32 6, %v1382
    %v1384 = vrot.slane %v1336, %v1383
    %1386 = vbcast.lane.b32.xlu0 %v1384, 256
    %v1387 = vpop.permute.xlu0 %1386
    %v1388 = vlaneseq
    %v1389 = vshrl.u32 %v1388, 7
    %v1390 = vsub.s32 7, %v1389
    %v1391 = vrot.slane %v1336, %v1390
    %1393 = vbcast.lane.b32.xlu0 %v1391, 256
    %v1394 = vpop.permute.xlu0 %1393
    %v1395 = vlaneseq
    %v1396 = vshrl.u32 %v1395, 7
    %v1397 = vsub.s32 0, %v1396
    %v1398 = vrot.slane %v1338, %v1397
    %1400 = vbcast.lane.b32.xlu0 %v1398, 256
    %v1401 = vpop.permute.xlu0 %1400
    %v1402 = vlaneseq
    %v1403 = vshrl.u32 %v1402, 7
    %v1404 = vsub.s32 1, %v1403
    %v1405 = vrot.slane %v1338, %v1404
    %1407 = vbcast.lane.b32.xlu0 %v1405, 256
    %v1408 = vpop.permute.xlu0 %1407
    %v1409 = vlaneseq
    %v1410 = vshrl.u32 %v1409, 7
    %v1411 = vsub.s32 2, %v1410
    %v1412 = vrot.slane %v1338, %v1411
    %1414 = vbcast.lane.b32.xlu0 %v1412, 256
    %v1415 = vpop.permute.xlu0 %1414
    %v1416 = vlaneseq
    %v1417 = vshrl.u32 %v1416, 7
    %v1418 = vsub.s32 3, %v1417
    %v1419 = vrot.slane %v1338, %v1418
    %1421 = vbcast.lane.b32.xlu0 %v1419, 256
    %v1422 = vpop.permute.xlu0 %1421
    %v1423 = vlaneseq
    %v1424 = vshrl.u32 %v1423, 7
    %v1425 = vsub.s32 4, %v1424
    %v1426 = vrot.slane %v1338, %v1425
    %1428 = vbcast.lane.b32.xlu0 %v1426, 256
    %v1429 = vpop.permute.xlu0 %1428
    %v1430 = vlaneseq
    %v1431 = vshrl.u32 %v1430, 7
    %v1432 = vsub.s32 5, %v1431
    %v1433 = vrot.slane %v1338, %v1432
    %1435 = vbcast.lane.b32.xlu0 %v1433, 256
    %v1436 = vpop.permute.xlu0 %1435
    %v1437 = vlaneseq
    %v1438 = vshrl.u32 %v1437, 7
    %v1439 = vsub.s32 6, %v1438
    %v1440 = vrot.slane %v1338, %v1439
    %1442 = vbcast.lane.b32.xlu0 %v1440, 256
    %v1443 = vpop.permute.xlu0 %1442
    %v1444 = vlaneseq
    %v1445 = vshrl.u32 %v1444, 7
    %v1446 = vsub.s32 7, %v1445
    %v1447 = vrot.slane %v1338, %v1446
    %1449 = vbcast.lane.b32.xlu0 %v1447, 256
    %v1450 = vpop.permute.xlu0 %1449
    %v1451 = vmul.f32 %v1345, %v822
    %v1452 = vmul.f32 %v1352, %v827
    %v1453 = vmul.f32 %v1359, %v832
    %v1454 = vmul.f32 %v1366, %v837
    %v1455 = vmul.f32 %v1373, %v842
    %v1456 = vmul.f32 %v1380, %v847
    %v1457 = vmul.f32 %v1387, %v852
    %v1458 = vmul.f32 %v1394, %v857
    %v1459 = vmul.f32 %v1401, %v927
    %v1460 = vmul.f32 %v1408, %v932
    %v1461 = vmul.f32 %v1415, %v937
    %v1462 = vmul.f32 %v1422, %v942
    %v1463 = vmul.f32 %v1429, %v947
    %v1464 = vmul.f32 %v1436, %v952
    %v1465 = vmul.f32 %v1443, %v957
    %v1466 = vmul.f32 %v1450, %v962
    %v1467 = vsel %vm219, %v1451, 0.0
    %v1468 = vrot.slane %v1467, 4
    %v1469 = vadd.f32 %v1467, %v1468
    %v1470 = vrot.slane %v1469, 2
    %v1471 = vadd.f32 %v1469, %v1470
    %v1472 = vrot.slane %v1471, 1
    %v1473 = vadd.f32 %v1471, %v1472
    %v1474 = vsel %vm219, %v1452, 0.0
    %v1475 = vrot.slane %v1474, 4
    %v1476 = vadd.f32 %v1474, %v1475
    %v1477 = vrot.slane %v1476, 2
    %v1478 = vadd.f32 %v1476, %v1477
    %v1479 = vrot.slane %v1478, 1
    %v1480 = vadd.f32 %v1478, %v1479
    %v1481 = vsel %vm219, %v1453, 0.0
    %v1482 = vrot.slane %v1481, 4
    %v1483 = vadd.f32 %v1481, %v1482
    %v1484 = vrot.slane %v1483, 2
    %v1485 = vadd.f32 %v1483, %v1484
    %v1486 = vrot.slane %v1485, 1
    %v1487 = vadd.f32 %v1485, %v1486
    %v1488 = vsel %vm219, %v1454, 0.0
    %v1489 = vrot.slane %v1488, 4
    %v1490 = vadd.f32 %v1488, %v1489
    %v1491 = vrot.slane %v1490, 2
    %v1492 = vadd.f32 %v1490, %v1491
    %v1493 = vrot.slane %v1492, 1
    %v1494 = vadd.f32 %v1492, %v1493
    %v1495 = vsel %vm219, %v1455, 0.0
    %v1496 = vrot.slane %v1495, 4
    %v1497 = vadd.f32 %v1495, %v1496
    %v1498 = vrot.slane %v1497, 2
    %v1499 = vadd.f32 %v1497, %v1498
    %v1500 = vrot.slane %v1499, 1
    %v1501 = vadd.f32 %v1499, %v1500
    %v1502 = vsel %vm219, %v1456, 0.0
    %v1503 = vrot.slane %v1502, 4
    %v1504 = vadd.f32 %v1502, %v1503
    %v1505 = vrot.slane %v1504, 2
    %v1506 = vadd.f32 %v1504, %v1505
    %v1507 = vrot.slane %v1506, 1
    %v1508 = vadd.f32 %v1506, %v1507
    %v1509 = vsel %vm219, %v1457, 0.0
    %v1510 = vrot.slane %v1509, 4
    %v1511 = vadd.f32 %v1509, %v1510
    %v1512 = vrot.slane %v1511, 2
    %v1513 = vadd.f32 %v1511, %v1512
    %v1514 = vrot.slane %v1513, 1
    %v1515 = vadd.f32 %v1513, %v1514
    %v1516 = vsel %vm219, %v1458, 0.0
    %v1517 = vrot.slane %v1516, 4
    %v1518 = vadd.f32 %v1516, %v1517
    %v1519 = vrot.slane %v1518, 2
    %v1520 = vadd.f32 %v1518, %v1519
    %v1521 = vrot.slane %v1520, 1
    %v1522 = vadd.f32 %v1520, %v1521
    %v1523 = vsel %vm219, %v1459, 0.0
    %v1524 = vrot.slane %v1523, 4
    %v1525 = vadd.f32 %v1523, %v1524
    %v1526 = vrot.slane %v1525, 2
    %v1527 = vadd.f32 %v1525, %v1526
    %v1528 = vrot.slane %v1527, 1
    %v1529 = vadd.f32 %v1527, %v1528
    %v1530 = vsel %vm219, %v1460, 0.0
    %v1531 = vrot.slane %v1530, 4
    %v1532 = vadd.f32 %v1530, %v1531
    %v1533 = vrot.slane %v1532, 2
    %v1534 = vadd.f32 %v1532, %v1533
    %v1535 = vrot.slane %v1534, 1
    %v1536 = vadd.f32 %v1534, %v1535
    %v1537 = vsel %vm219, %v1461, 0.0
    %v1538 = vrot.slane %v1537, 4
    %v1539 = vadd.f32 %v1537, %v1538
    %v1540 = vrot.slane %v1539, 2
    %v1541 = vadd.f32 %v1539, %v1540
    %v1542 = vrot.slane %v1541, 1
    %v1543 = vadd.f32 %v1541, %v1542
    %v1544 = vsel %vm219, %v1462, 0.0
    %v1545 = vrot.slane %v1544, 4
    %v1546 = vadd.f32 %v1544, %v1545
    %v1547 = vrot.slane %v1546, 2
    %v1548 = vadd.f32 %v1546, %v1547
    %v1549 = vrot.slane %v1548, 1
    %v1550 = vadd.f32 %v1548, %v1549
    %v1551 = vsel %vm219, %v1463, 0.0
    %v1552 = vrot.slane %v1551, 4
    %v1553 = vadd.f32 %v1551, %v1552
    %v1554 = vrot.slane %v1553, 2
    %v1555 = vadd.f32 %v1553, %v1554
    %v1556 = vrot.slane %v1555, 1
    %v1557 = vadd.f32 %v1555, %v1556
    %v1558 = vsel %vm219, %v1464, 0.0
    %v1559 = vrot.slane %v1558, 4
    %v1560 = vadd.f32 %v1558, %v1559
    %v1561 = vrot.slane %v1560, 2
    %v1562 = vadd.f32 %v1560, %v1561
    %v1563 = vrot.slane %v1562, 1
    %v1564 = vadd.f32 %v1562, %v1563
    %v1565 = vsel %vm219, %v1465, 0.0
    %v1566 = vrot.slane %v1565, 4
    %v1567 = vadd.f32 %v1565, %v1566
    %v1568 = vrot.slane %v1567, 2
    %v1569 = vadd.f32 %v1567, %v1568
    %v1570 = vrot.slane %v1569, 1
    %v1571 = vadd.f32 %v1569, %v1570
    %v1572 = vsel %vm219, %v1466, 0.0
    %v1573 = vrot.slane %v1572, 4
    %v1574 = vadd.f32 %v1572, %v1573
    %v1575 = vrot.slane %v1574, 2
    %v1576 = vadd.f32 %v1574, %v1575
    %v1577 = vrot.slane %v1576, 1
    %v1578 = vadd.f32 %v1576, %v1577
    %v1579 = vld [vmem:[%s6] sm:$0x7]
    %v1580 = vld [vmem:[#allocation8] sm:$0xff]
    %v1581 = vld [vmem:[#allocation8 + $0x8] sm:$0xff]
    %v1582 = vlaneseq
    %v1583 = vshrl.u32 %v1582, 7
    %v1584 = vsub.s32 0, %v1583
    %v1585 = vrot.slane %v1579, %v1584
    %v1602 = vsel %vm1291, %v1480, %v1473
    %v1603 = vsel %vm1293, %v1487, %v1602
    %v1604 = vsel %vm1295, %v1494, %v1603
    %v1605 = vsel %vm1297, %v1501, %v1604
    %v1606 = vsel %vm1299, %v1508, %v1605
    %v1607 = vsel %vm1301, %v1515, %v1606
    %v1608 = vsel %vm1303, %v1522, %v1607
    %v1609 = vsel %vm1291, %v1536, %v1529
    %v1610 = vsel %vm1293, %v1543, %v1609
    %v1611 = vsel %vm1295, %v1550, %v1610
    %v1612 = vsel %vm1297, %v1557, %v1611
    %v1613 = vsel %vm1299, %v1564, %v1612
    %v1614 = vsel %vm1301, %v1571, %v1613
    %v1615 = vsel %vm1303, %v1578, %v1614
    %v1616 = vsel %vm219, %v1608, 0
    %v1618 = vsel %vm219, %v1615, 0
    %1620 = vmatprep.subr.mxu0 0.0
    %1621 = vmatpush1.msra.mxu0 0.0
    %1622 = vmatprep.subr.mxu0 0.0
    %1623 = vmatpush1.msra.mxu0 0.0
    %1624 = vmatprep.subr.mxu0 0.0
    %1625 = vmatpush1.msra.mxu0 0.0
    %1626 = vmatprep.subr.mxu0 0.0
    %1627 = vmatpush1.msra.mxu0 0.0
    %1628 = vmatprep.subr.mxu0 0.0
    %1629 = vmatpush1.msra.mxu0 0.0
    %1630 = vmatprep.subr.mxu0 0.0
    %1631 = vmatpush1.msra.mxu0 0.0
    %1632 = vmatprep.subr.mxu0 0.0
    %1633 = vmatpush1.msra.mxu0 0.0
    %1634 = vmatprep.subr.mxu0 0.0
    %1635 = vmatpush1.msra.mxu0 0.0
    %1636 = vmatprep.subr.mxu0 0.0
    %1637 = vmatpush1.msra.mxu0 0.0
    %1638 = vmatprep.subr.mxu0 0.0
    %1639 = vmatpush1.msra.mxu0 0.0
    %1640 = vmatprep.subr.mxu0 0.0
    %1641 = vmatpush1.msra.mxu0 0.0
    %1642 = vmatprep.subr.mxu0 0.0
    %1643 = vmatpush1.msra.mxu0 0.0
    %1644 = vmatprep.subr.mxu0 0.0
    %1645 = vmatpush1.msra.mxu0 0.0
    %1646 = vmatprep.subr.mxu0 0.0
    %1647 = vmatpush1.msra.mxu0 0.0
    %1648 = vmatprep.subr.mxu0 0.0
    %1649 = vmatpush1.msra.mxu0 %v1581
    %1650 = vmatprep.subr.mxu0 0.0
    %1651 = vmatpush1.msra.mxu0 %v1580
    %1652 = vmatprep.subr.mxu0 0.0
    %1653 = vmatpush2.msra.mxu0 0.0
    %1654 = vmatprep.subr.mxu0 0.0
    %1655 = vmatpush2.msra.mxu0 0.0
    %1656 = vmatprep.subr.mxu0 0.0
    %1657 = vmatpush2.msra.mxu0 0.0
    %1658 = vmatprep.subr.mxu0 0.0
    %1659 = vmatpush2.msra.mxu0 0.0
    %1660 = vmatprep.subr.mxu0 0.0
    %1661 = vmatpush2.msra.mxu0 0.0
    %1662 = vmatprep.subr.mxu0 0.0
    %1663 = vmatpush2.msra.mxu0 0.0
    %1664 = vmatprep.subr.mxu0 0.0
    %1665 = vmatpush2.msra.mxu0 0.0
    %1666 = vmatprep.subr.mxu0 0.0
    %1667 = vmatpush2.msra.mxu0 0.0
    %1668 = vmatprep.subr.mxu0 0.0
    %1669 = vmatpush2.msra.mxu0 0.0
    %1670 = vmatprep.subr.mxu0 0.0
    %1671 = vmatpush2.msra.mxu0 0.0
    %1672 = vmatprep.subr.mxu0 0.0
    %1673 = vmatpush2.msra.mxu0 0.0
    %1674 = vmatprep.subr.mxu0 0.0
    %1675 = vmatpush2.msra.mxu0 0.0
    %1676 = vmatprep.subr.mxu0 0.0
    %1677 = vmatpush2.msra.mxu0 0.0
    %1678 = vmatprep.subr.mxu0 0.0
    %1679 = vmatpush2.msra.mxu0 0.0
    %1680 = vmatprep.subr.mxu0 0.0
    %1681 = vmatpush2.msra.mxu0 0.0
    %1682 = vmatprep.subr.mxu0 0.0
    %1683 = vmatpush2.msra.mxu0 0.0
    %1684 = vmatprep.mubr.f32.mxu0 0.0
    %1685 = vmatmul.mubr.f32.gmra.mxu0 %v1616
    %v1686 = vpop.f32.mrf.mxu0
    %v1687 = vadd.f32 %v1585, %v1686
    %v1688 = vpop.f32.mrf.mxu0
    %1689 = vmatprep.mubr.f32.mxu0 0.0
    %1690 = vmatmul.mubr.f32.gmra.mxu0 %v1618
    %v1691 = vpop.f32.mrf.mxu0
    %v1692 = vadd.f32 %v1585, %v1691
    %v1693 = vpop.f32.mrf.mxu0
    %1694 = vdwg.mxu0
    %v1695 = vadd.f32 %v1687, %v85
    %v1696 = vadd.f32 %v1692, %v86
    %v1697 = vsel %vm219, %v1695, 0.0
    %1698 = vadd.xlane.f32.xlu0 %v1697
    %v1699 = vpop.xlane.xlu0 %1698
    %v1700 = vsel %vm219, %v1696, 0.0
    %1701 = vadd.xlane.f32.xlu0 %v1700
    %v1702 = vpop.xlane.xlu0 %1701
    %v1703 = vrcp.pop 16.0
    %v1704 = vmul.f32 %v1699, %v1703
    %v1705 = vmul.f32 %v1702, %v1703
    %v1706 = vsub.f32 %v1695, %v1704
    %v1707 = vsub.f32 %v1696, %v1705
    %v1708 = vmul.f32 %v1706, %v1706
    %v1709 = vmul.f32 %v1707, %v1707
    %v1710 = vsel %vm219, %v1708, 0.0
    %1711 = vadd.xlane.f32.xlu0 %v1710
    %v1712 = vpop.xlane.xlu0 %1711
    %v1713 = vsel %vm219, %v1709, 0.0
    %1714 = vadd.xlane.f32.xlu0 %v1713
    %v1715 = vpop.xlane.xlu0 %1714
    %v1716 = vmul.f32 %v1712, %v1703
    %v1717 = vmul.f32 %v1715, %v1703
    %v1718 = vadd.f32 %v1716, 1e-05
    %v1719 = vadd.f32 %v1717, 1e-05
    %v1720 = vrsqrt.pop %v1718
    %v1721 = vrsqrt.pop %v1719
    %v1722 = vmul.f32 %v1706, %v1720
    %v1723 = vmul.f32 %v1707, %v1721
    %v1724 = vlaneseq
    %v1725 = vshrl.u32 %v1724, 7
    %v1726 = vsub.s32 1, %v1725
    %v1727 = vrot.slane %v1579, %v1726
    %v1728 = vmul.f32 %v1722, %v1727
    %v1729 = vmul.f32 %v1723, %v1727
    %v1730 = vlaneseq
    %v1731 = vshrl.u32 %v1730, 7
    %v1732 = vsub.s32 2, %v1731
    %v1733 = vrot.slane %v1579, %v1732
    %v1734 = vadd.f32 %v1728, %v1733
    %v1735 = vadd.f32 %v1729, %v1733
    %1736 = vst.msk [vmem:[#allocation10] sm:$0xff] %vm219, %v1734
    %1737 = vst.msk [vmem:[#allocation10 + $0x8] sm:$0xff] %vm219, %v1735
    %1738 = vst.msk [vmem:[#allocation11] sm:$0xff] %vm1316, %v1336
    %1739 = vst.msk [vmem:[#allocation11 + $0x8] sm:$0xff] %vm1316, %v1338
    // Predicated region
    $region46: #{tpu_custom_call.1} parent=1 // pred_check
      _
    $region47: #{tpu_custom_call.1} parent=1 // pred_check_branch
      %1741 = sbr.rel (0) target = $region49
    $region48: #{tpu_custom_call.1} parent=1 // pred_region
      %s1743 = ssub.s32 256, 256
      %1744 = vsyncadd [#allocation4], %s1743
      %s1745 = sshll.u32 [#allocation10], 4
      %s1746 = int_to_ptr.vmem [resolvable:$true] %s1745
      %1751 = dma.vmem_to_hbm [thread:$0]  %s1746, 256, %s7, [#allocation4], 128, 128, 8
    $region49: #{tpu_custom_call.1} parent=1 // pred_fallthru
      _
    // Predicated region
    $region50: #{tpu_custom_call.1} parent=1 // pred_check
      _
    $region51: #{tpu_custom_call.1} parent=1 // pred_check_branch
      %1753 = sbr.rel (0) target = $region53
    $region52: #{tpu_custom_call.1} parent=1 // pred_region
      %s1755 = ssub.s32 256, 256
      %1756 = vsyncadd [#allocation12], %s1755
      %s1757 = sshll.u32 [#allocation11], 4
      %s1758 = int_to_ptr.vmem [resolvable:$true] %s1757
      %1763 = dma.vmem_to_hbm [thread:$0]  %s1758, 256, %s8, [#allocation12], 128, 128, 8
    $region53: #{tpu_custom_call.1} parent=1 // pred_fallthru
      _
    // Predicated region
    $region54: #{tpu_custom_call.1} parent=1 // pred_check
      _
    $region55: #{tpu_custom_call.1} parent=1 // pred_check_branch
      %1765 = sbr.rel (0) target = $region57
    $region56: #{tpu_custom_call.1} parent=1 // pred_region
      %1766 = dma.done [#allocation4], 256
    $region57: #{tpu_custom_call.1} parent=1 // pred_fallthru
      _
    // Predicated region
    $region58: #{tpu_custom_call.1} parent=1 // pred_check
      _
    $region59: #{tpu_custom_call.1} parent=1 // pred_check_branch
      %1768 = sbr.rel (0) target = $region61
    $region60: #{tpu_custom_call.1} parent=1 // pred_region
      %1769 = dma.done [#allocation12], 256
    $region61: #{tpu_custom_call.1} parent=1 // pred_fallthru
      _
    %1770 = vsyncpa [#allocation3], 1
    %1771 = vsyncpa [#allocation6], 1
    %1772 = vsyncpa [#allocation9], 1
    %1773 = vsyncpa [#allocation4], 1
    %1774 = vsyncpa [#allocation12], 1

</llo_original>
